<compile_context>
chip_gen: v7x
topology: tpu7x:2x2x1
jax: 0.10.0
libtpu: 0.0.40
codegen_flags: <defaults>
</compile_context>

<pallas_src>
import jax
import jax.numpy as jnp
from jax.experimental import pallas as pl
from jax.experimental.pallas import tpu as pltpu

EPS = 1e-5


def _upblock_kernel(xp_ref,     # (N, H+2, W*Cin)   H-zero-padded, lane-packed input
                    t1_ref,     # (3, W*Cin,  W*Cout)  conv1 block-Toeplitz weights
                    t2_ref,     # (3, W*Cout, W*Cout)  conv2 block-Toeplitz weights
                    g_ref,      # (W*Cout, Cout)  lane -> channel fold (0/1)
                    gt_ref,     # (Cout, W*Cout)  channel -> lane broadcast (0/1)
                    d_ref,      # (W*Cout, 2*W*Cout)  nearest-2x lane duplication (0/1)
                    r_ref,      # (2H, H)             nearest-2x row duplication (0/1)
                    bnp_ref,    # (4, Cout)  rows = [gamma1, beta1, gamma2, beta2]
                    alpha_ref,  # (1, 1) SMEM  shared PReLU alpha
                    out_ref,    # (N, 2H, 2*W*Cout)  lane-dense output
                    yp_ref):    # scratch (N, H+2, W*Cout)  H-padded conv2 input
    N, Hp, _ = xp_ref.shape
    H = Hp - 2
    WCo = t1_ref.shape[2]
    Cout = g_ref.shape[1]
    W = WCo // Cout
    inv_n = 1.0 / float(N * H * W)

    g = g_ref[...]        # (W*Cout, Cout)
    gt = gt_ref[...]      # (Cout, W*Cout)

    def row_conv(src_ref, t_ref):
        # 'same' 3x3 conv on lane-packed rows: one MXU matmul per kh tap.
        k = t_ref.shape[1]
        acc = jnp.dot(src_ref[:, 0:H, :].reshape(N * H, k), t_ref[0],
                      preferred_element_type=jnp.float32)
        for kh in (1, 2):
            rows = src_ref[:, kh:kh + H, :].reshape(N * H, k)
            acc = acc + jnp.dot(rows, t_ref[kh],
                                preferred_element_type=jnp.float32)
        return acc                                        # (N*H, W*Cout)

    def batchnorm(y, gamma, beta):
        # Training-mode BN folded to one scale/shift pass (bias-free,
        # single-pass sum / sum-of-squares).
        lane_sum = jnp.sum(y, axis=0, keepdims=True)      # (1, W*Cout)
        lane_ssq = jnp.sum(y * y, axis=0, keepdims=True)  # (1, W*Cout)
        mean = jnp.dot(lane_sum, g, preferred_element_type=jnp.float32) * inv_n
        ex2 = jnp.dot(lane_ssq, g, preferred_element_type=jnp.float32) * inv_n
        var = jnp.maximum(ex2 - mean * mean, 0.0)         # (1, Cout)
        scale_c = gamma * jax.lax.rsqrt(var + EPS)        # (1, Cout)
        shift_c = beta - mean * scale_c                   # (1, Cout)
        scale = jnp.dot(scale_c, gt, preferred_element_type=jnp.float32)
        shift = jnp.dot(shift_c, gt, preferred_element_type=jnp.float32)
        return y * scale + shift                          # (N*H, W*Cout)

    # ---- conv1 (+bias dropped: cancels under batch-stat BN) + BN1 ----------
    y = batchnorm(row_conv(xp_ref, t1_ref), bnp_ref[0:1, :], bnp_ref[1:2, :])

    # ---- zero-pad H for conv2 directly in the VMEM scratch ref --------------
    zrow = jnp.zeros((N, 1, WCo), jnp.float32)
    yp_ref[:, 0:1, :] = zrow
    yp_ref[:, H + 1:H + 2, :] = zrow
    yp_ref[:, 1:H + 1, :] = y.reshape(N, H, WCo)

    # ---- conv2 + BN2 ---------------------------------------------------------
    z = batchnorm(row_conv(yp_ref, t2_ref), bnp_ref[2:3, :], bnp_ref[3:4, :])

    # ---- PReLU (single shared alpha; elementwise => commutes with upsample) --
    alpha = alpha_ref[0, 0]
    z = jnp.maximum(z, 0.0) + alpha * jnp.minimum(z, 0.0)

    # ---- fused nearest-2x upsample: lane duplication (D) + row duplication (R)
    d = d_ref[...]        # (W*Cout, 2*W*Cout)
    r = r_ref[...]        # (2H, H)
    for n in range(N):
        zn = z[n * H:(n + 1) * H, :]                                    # (H, W*Cout)
        up_w = jnp.dot(zn, d, preferred_element_type=jnp.float32)       # (H, 2W*Cout)
        out_ref[n] = jnp.dot(r, up_w, preferred_element_type=jnp.float32)  # (2H, 2W*Cout)


def _row_toeplitz(w_hwio, W):
    """Fold the kw taps + 'same' W-padding of a 3x3 conv into per-kh matrices.

    Returns T of shape (3, W*Cin, W*Cout) such that the 'same' conv is
        out_row(h) = sum_kh  in_row(h + kh - 1, zero-padded)  @  T[kh]
    with rows lane-packed as (w*C + c).
    """
    KH, KW, Ci, Co = w_hwio.shape
    mats = []
    for kh in range(KH):
        m = jnp.zeros((W * Ci, W * Co), w_hwio.dtype)
        for kw in range(KW):
            # sel[wi, wo] = 1  iff  wi == wo + kw - 1  (W-edge taps fall off -> zero pad)
            sel = jnp.eye(W, W, k=1 - kw, dtype=w_hwio.dtype)
            m = m + jnp.kron(sel, w_hwio[kh, kw])
        mats.append(m)
    return jnp.stack(mats)


@jax.jit
def upblock_forward(x_nchw, params):
    """x_nchw: (N, Cin, H, W) float32  ->  (N, Cout, 2H, 2W) float32."""
    x = jnp.transpose(x_nchw, (0, 2, 3, 1)).astype(jnp.float32)       # NHWC
    N, H, W, Cin = x.shape
    Cout = params["w1"].shape[-1]
    WCi, WCo = W * Cin, W * Cout
    f32 = jnp.float32

    # Lane-packed rows, zero-padded along H for conv1's 'same' padding.
    xp = jnp.pad(x.reshape(N, H, WCi), ((0, 0), (1, 1), (0, 0)))

    # Host-side constant matrices (built once under jit).
    t1 = _row_toeplitz(params["w1"], W)                                # (3, W*Cin,  W*Cout)
    t2 = _row_toeplitz(params["w2"], W)                                # (3, W*Cout, W*Cout)
    g = jnp.tile(jnp.eye(Cout, dtype=f32), (W, 1))                     # (W*Cout, Cout)
    gt = g.T                                                           # (Cout, W*Cout)
    d = jnp.kron(jnp.kron(jnp.eye(W, dtype=f32), jnp.ones((1, 2), f32)),
                 jnp.eye(Cout, dtype=f32))                             # (W*Cout, 2W*Cout)
    r = jnp.kron(jnp.eye(H, dtype=f32), jnp.ones((2, 1), f32))         # (2H, H)
    bnp = jnp.stack([params["g1"], params["be1"],
                     params["g2"], params["be2"]]).astype(f32)         # (4, Cout)
    alpha = jnp.reshape(params["alpha"], (1, 1)).astype(f32)
    # NOTE: conv biases b1/b2 cancel exactly under training-mode BatchNorm,
    # so they are not passed to the kernel (the reference below keeps them).

    # Scoped VMEM limit sized from the actual working set (+ headroom).
    work_bytes = 4 * (xp.size + t1.size + t2.size + g.size + gt.size + d.size
                      + r.size + bnp.size
                      + N * (H + 2) * WCo            # scratch
                      + N * 2 * H * 2 * WCo)         # output
    vmem_limit = int(min(max(2 * work_bytes + (1 << 20), 8 << 20), 48 << 20))

    vmem = pl.BlockSpec(memory_space=pltpu.MemorySpace.VMEM)
    smem = pl.BlockSpec(memory_space=pltpu.MemorySpace.SMEM)

    out = pl.pallas_call(
        _upblock_kernel,
        out_shape=jax.ShapeDtypeStruct((N, 2 * H, 2 * WCo), f32),
        in_specs=[vmem] * 8 + [smem],
        out_specs=vmem,
        scratch_shapes=[pltpu.VMEM((N, H + 2, WCo), f32)],
        compiler_params=pltpu.CompilerParams(vmem_limit_bytes=vmem_limit),
    )(xp, t1, t2, g, gt, d, r, bnp, alpha)

    # (N, 2H, 2W*Cout) lane-dense slab -> NCHW (layout plumbing only).
    out = out.reshape(N, 2 * H, 2 * W, Cout)
    return jnp.transpose(out, (0, 3, 1, 2))


def make_params(key, in_channels, out_channels):
    ks = jax.random.split(key, 8)
    return {
        "w1": 0.2 * jax.random.normal(ks[0], (3, 3, in_channels, out_channels), jnp.float32),
        "b1": 0.1 * jax.random.normal(ks[1], (out_channels,), jnp.float32),
        "g1": 1.0 + 0.1 * jax.random.normal(ks[2], (out_channels,), jnp.float32),
        "be1": 0.1 * jax.random.normal(ks[3], (out_channels,), jnp.float32),
        "w2": 0.2 * jax.random.normal(ks[4], (3, 3, out_channels, out_channels), jnp.float32),
        "b2": 0.1 * jax.random.normal(ks[5], (out_channels,), jnp.float32),
        "g2": 1.0 + 0.1 * jax.random.normal(ks[6], (out_channels,), jnp.float32),
        "be2": 0.1 * jax.random.normal(ks[7], (out_channels,), jnp.float32),
        "alpha": jnp.float32(0.25),        # PReLU default init (single shared alpha)
    }


def reference_forward(x_nchw, p):
    """Pure-JAX reference (XLA convs, with biases) for correctness checking."""
    x = jnp.transpose(x_nchw, (0, 2, 3, 1)).astype(jnp.float32)

    def conv(x, w, b):
        y = jax.lax.conv_general_dilated(
            x, w, window_strides=(1, 1), padding="SAME",
            dimension_numbers=("NHWC", "HWIO", "NHWC"))
        return y + b

    def bn(y, g, be):
        m = jnp.mean(y, axis=(0, 1, 2), keepdims=True)
        v = jnp.mean((y - m) ** 2, axis=(0, 1, 2), keepdims=True)
        return (y - m) * jax.lax.rsqrt(v + EPS) * g + be

    y = bn(conv(x, p["w1"], p["b1"]), p["g1"], p["be1"])
    y = bn(conv(y, p["w2"], p["b2"]), p["g2"], p["be2"])
    y = jnp.repeat(jnp.repeat(y, 2, axis=1), 2, axis=2)
    y = jnp.maximum(y, 0.0) + p["alpha"] * jnp.minimum(y, 0.0)
    return jnp.transpose(y, (0, 3, 1, 2))


if __name__ == "__main__":
    key = jax.random.PRNGKey(0)
    kx, kp = jax.random.split(key)

    N, Cin, Cout, HW = 2, 4, 8, 16
    x = jax.random.normal(kx, (N, Cin, HW, HW), jnp.float32)   # NCHW, like PyTorch
    params = make_params(kp, Cin, Cout)

    out = jax.block_until_ready(upblock_forward(x, params))
    ref = jax.block_until_ready(reference_forward(x, params))

    assert out.shape == (N, Cout, 2 * HW, 2 * HW), out.shape
    err = float(jnp.max(jnp.abs(out - ref)))
    assert err < 2e-3, err

    print("KERNEL_OK")
</pallas_src>

<mosaic_0001>
module attributes {stable_mosaic.version = 11 : i64} {
  func.func @_upblock_kernel(%arg0: memref<2x18x64xf32, #tpu.memory_space<vmem>>, %arg1: memref<3x64x128xf32, #tpu.memory_space<vmem>>, %arg2: memref<3x128x128xf32, #tpu.memory_space<vmem>>, %arg3: memref<128x8xf32, #tpu.memory_space<vmem>>, %arg4: memref<8x128xf32, #tpu.memory_space<vmem>>, %arg5: memref<128x256xf32, #tpu.memory_space<vmem>>, %arg6: memref<32x16xf32, #tpu.memory_space<vmem>>, %arg7: memref<4x8xf32, #tpu.memory_space<vmem>>, %arg8: memref<1x1xf32, #tpu.memory_space<smem>>, %arg9: memref<2x32x256xf32, #tpu.memory_space<vmem>>, %arg10: memref<2x18x128xf32, #tpu.memory_space<vmem>>) attributes {dimension_semantics = [], scalar_prefetch = 0 : i64, scratch_operands = 1 : i64, tpu.core_type = #tpu.core_type<tc>} {
    %c0 = arith.constant 0 : index
    %c0_0 = arith.constant 0 : index
    %0 = vector.load %arg3[%c0, %c0_0] : memref<128x8xf32, #tpu.memory_space<vmem>>, vector<128x8xf32>
    %c0_1 = arith.constant 0 : index
    %c0_2 = arith.constant 0 : index
    %1 = vector.load %arg4[%c0_1, %c0_2] : memref<8x128xf32, #tpu.memory_space<vmem>>, vector<8x128xf32>
    %c0_3 = arith.constant 0 : index
    %c0_4 = arith.constant 0 : index
    %c0_5 = arith.constant 0 : index
    %2 = vector.load %arg0[%c0_3, %c0_4, %c0_5] : memref<2x18x64xf32, #tpu.memory_space<vmem>>, vector<2x16x64xf32>
    %3 = vector.shape_cast %2 : vector<2x16x64xf32> to vector<32x64xf32>
    %c0_6 = arith.constant 0 : index
    %c0_7 = arith.constant 0 : index
    %c0_8 = arith.constant 0 : index
    %4 = vector.load %arg1[%c0_6, %c0_7, %c0_8] : memref<3x64x128xf32, #tpu.memory_space<vmem>>, vector<1x64x128xf32>
    %5 = vector.shape_cast %4 : vector<1x64x128xf32> to vector<64x128xf32>
    %cst = arith.constant dense<0.000000e+00> : vector<32x128xf32>
    %6 = tpu.matmul %3, %5, %cst {dimension_numbers = #tpu.dot_dimension_numbers<[1], [0], [0], [1], [0, 0, 1, 1], [], []>} : vector<32x64xf32>, vector<64x128xf32>, vector<32x128xf32> -> vector<32x128xf32>
    %c0_9 = arith.constant 0 : index
    %c1 = arith.constant 1 : index
    %c0_10 = arith.constant 0 : index
    %7 = vector.load %arg0[%c0_9, %c1, %c0_10] : memref<2x18x64xf32, #tpu.memory_space<vmem>>, vector<2x16x64xf32>
    %8 = vector.shape_cast %7 : vector<2x16x64xf32> to vector<32x64xf32>
    %c1_11 = arith.constant 1 : index
    %c0_12 = arith.constant 0 : index
    %c0_13 = arith.constant 0 : index
    %9 = vector.load %arg1[%c1_11, %c0_12, %c0_13] : memref<3x64x128xf32, #tpu.memory_space<vmem>>, vector<1x64x128xf32>
    %10 = vector.shape_cast %9 : vector<1x64x128xf32> to vector<64x128xf32>
    %cst_14 = arith.constant dense<0.000000e+00> : vector<32x128xf32>
    %11 = tpu.matmul %8, %10, %cst_14 {dimension_numbers = #tpu.dot_dimension_numbers<[1], [0], [0], [1], [0, 0, 1, 1], [], []>} : vector<32x64xf32>, vector<64x128xf32>, vector<32x128xf32> -> vector<32x128xf32>
    %12 = arith.addf %6, %11 : vector<32x128xf32>
    %c0_15 = arith.constant 0 : index
    %c2 = arith.constant 2 : index
    %c0_16 = arith.constant 0 : index
    %13 = vector.load %arg0[%c0_15, %c2, %c0_16] : memref<2x18x64xf32, #tpu.memory_space<vmem>>, vector<2x16x64xf32>
    %14 = vector.shape_cast %13 : vector<2x16x64xf32> to vector<32x64xf32>
    %c2_17 = arith.constant 2 : index
    %c0_18 = arith.constant 0 : index
    %c0_19 = arith.constant 0 : index
    %15 = vector.load %arg1[%c2_17, %c0_18, %c0_19] : memref<3x64x128xf32, #tpu.memory_space<vmem>>, vector<1x64x128xf32>
    %16 = vector.shape_cast %15 : vector<1x64x128xf32> to vector<64x128xf32>
    %cst_20 = arith.constant dense<0.000000e+00> : vector<32x128xf32>
    %17 = tpu.matmul %14, %16, %cst_20 {dimension_numbers = #tpu.dot_dimension_numbers<[1], [0], [0], [1], [0, 0, 1, 1], [], []>} : vector<32x64xf32>, vector<64x128xf32>, vector<32x128xf32> -> vector<32x128xf32>
    %18 = arith.addf %12, %17 : vector<32x128xf32>
    %c0_21 = arith.constant 0 : index
    %c0_22 = arith.constant 0 : index
    %19 = vector.load %arg7[%c0_21, %c0_22] : memref<4x8xf32, #tpu.memory_space<vmem>>, vector<1x8xf32>
    %c1_23 = arith.constant 1 : index
    %c0_24 = arith.constant 0 : index
    %20 = vector.load %arg7[%c1_23, %c0_24] : memref<4x8xf32, #tpu.memory_space<vmem>>, vector<1x8xf32>
    %cst_25 = arith.constant dense<0.000000e+00> : vector<128xf32>
    %21 = vector.multi_reduction <add>, %18, %cst_25 [0] : vector<32x128xf32> to vector<128xf32>
    %22 = vector.shape_cast %21 : vector<128xf32> to vector<1x128xf32>
    %23 = arith.mulf %18, %18 : vector<32x128xf32>
    %cst_26 = arith.constant dense<0.000000e+00> : vector<128xf32>
    %24 = vector.multi_reduction <add>, %23, %cst_26 [0] : vector<32x128xf32> to vector<128xf32>
    %25 = vector.shape_cast %24 : vector<128xf32> to vector<1x128xf32>
    %cst_27 = arith.constant dense<0.000000e+00> : vector<1x8xf32>
    %26 = tpu.matmul %22, %0, %cst_27 {dimension_numbers = #tpu.dot_dimension_numbers<[1], [0], [0], [1], [0, 0, 1, 1], [], []>} : vector<1x128xf32>, vector<128x8xf32>, vector<1x8xf32> -> vector<1x8xf32>
    %cst_28 = arith.constant 0.001953125 : f32
    %27 = vector.broadcast %cst_28 : f32 to vector<1x8xf32>
    %28 = arith.mulf %26, %27 : vector<1x8xf32>
    %cst_29 = arith.constant dense<0.000000e+00> : vector<1x8xf32>
    %29 = tpu.matmul %25, %0, %cst_29 {dimension_numbers = #tpu.dot_dimension_numbers<[1], [0], [0], [1], [0, 0, 1, 1], [], []>} : vector<1x128xf32>, vector<128x8xf32>, vector<1x8xf32> -> vector<1x8xf32>
    %cst_30 = arith.constant 0.001953125 : f32
    %30 = vector.broadcast %cst_30 : f32 to vector<1x8xf32>
    %31 = arith.mulf %29, %30 : vector<1x8xf32>
    %32 = arith.mulf %28, %28 : vector<1x8xf32>
    %33 = arith.subf %31, %32 : vector<1x8xf32>
    %cst_31 = arith.constant 0.000000e+00 : f32
    %34 = vector.broadcast %cst_31 : f32 to vector<1x8xf32>
    %35 = arith.maximumf %33, %34 : vector<1x8xf32>
    %cst_32 = arith.constant 9.99999974E-6 : f32
    %36 = vector.broadcast %cst_32 : f32 to vector<1x8xf32>
    %37 = arith.addf %35, %36 : vector<1x8xf32>
    %38 = math.rsqrt %37 : vector<1x8xf32>
    %39 = arith.mulf %19, %38 : vector<1x8xf32>
    %40 = arith.mulf %28, %39 : vector<1x8xf32>
    %41 = arith.subf %20, %40 : vector<1x8xf32>
    %cst_33 = arith.constant dense<0.000000e+00> : vector<1x128xf32>
    %42 = tpu.matmul %39, %1, %cst_33 {dimension_numbers = #tpu.dot_dimension_numbers<[1], [0], [0], [1], [0, 0, 1, 1], [], []>} : vector<1x8xf32>, vector<8x128xf32>, vector<1x128xf32> -> vector<1x128xf32>
    %cst_34 = arith.constant dense<0.000000e+00> : vector<1x128xf32>
    %43 = tpu.matmul %41, %1, %cst_34 {dimension_numbers = #tpu.dot_dimension_numbers<[1], [0], [0], [1], [0, 0, 1, 1], [], []>} : vector<1x8xf32>, vector<8x128xf32>, vector<1x128xf32> -> vector<1x128xf32>
    %44 = vector.broadcast %42 : vector<1x128xf32> to vector<32x128xf32>
    %45 = arith.mulf %18, %44 : vector<32x128xf32>
    %46 = vector.broadcast %43 : vector<1x128xf32> to vector<32x128xf32>
    %47 = arith.addf %45, %46 : vector<32x128xf32>
    %cst_35 = arith.constant 0.000000e+00 : f32
    %48 = vector.broadcast %cst_35 : f32 to vector<2x1x128xf32>
    %c0_36 = arith.constant 0 : index
    %c0_37 = arith.constant 0 : index
    %c0_38 = arith.constant 0 : index
    %49 = vector.load %arg10[%c0_36, %c0_37, %c0_38] : memref<2x18x128xf32, #tpu.memory_space<vmem>>, vector<2x1x128xf32>
    tpu.vector_store %arg10[%c0_36, %c0_37, %c0_38], %48 {strides = array<i32>} : memref<2x18x128xf32, #tpu.memory_space<vmem>>, vector<2x1x128xf32>,
    %c0_39 = arith.constant 0 : index
    %c17 = arith.constant 17 : index
    %c0_40 = arith.constant 0 : index
    %50 = vector.load %arg10[%c0_39, %c17, %c0_40] : memref<2x18x128xf32, #tpu.memory_space<vmem>>, vector<2x1x128xf32>
    tpu.vector_store %arg10[%c0_39, %c17, %c0_40], %48 {strides = array<i32>} : memref<2x18x128xf32, #tpu.memory_space<vmem>>, vector<2x1x128xf32>,
    %51 = vector.shape_cast %47 : vector<32x128xf32> to vector<2x16x128xf32>
    %c0_41 = arith.constant 0 : index
    %c1_42 = arith.constant 1 : index
    %c0_43 = arith.constant 0 : index
    %52 = vector.load %arg10[%c0_41, %c1_42, %c0_43] : memref<2x18x128xf32, #tpu.memory_space<vmem>>, vector<2x16x128xf32>
    tpu.vector_store %arg10[%c0_41, %c1_42, %c0_43], %51 {strides = array<i32>} : memref<2x18x128xf32, #tpu.memory_space<vmem>>, vector<2x16x128xf32>,
    %c0_44 = arith.constant 0 : index
    %c0_45 = arith.constant 0 : index
    %c0_46 = arith.constant 0 : index
    %53 = vector.load %arg10[%c0_44, %c0_45, %c0_46] : memref<2x18x128xf32, #tpu.memory_space<vmem>>, vector<2x16x128xf32>
    %54 = vector.shape_cast %53 : vector<2x16x128xf32> to vector<32x128xf32>
    %c0_47 = arith.constant 0 : index
    %c0_48 = arith.constant 0 : index
    %c0_49 = arith.constant 0 : index
    %55 = vector.load %arg2[%c0_47, %c0_48, %c0_49] : memref<3x128x128xf32, #tpu.memory_space<vmem>>, vector<1x128x128xf32>
    %56 = vector.shape_cast %55 : vector<1x128x128xf32> to vector<128x128xf32>
    %cst_50 = arith.constant dense<0.000000e+00> : vector<32x128xf32>
    %57 = tpu.matmul %54, %56, %cst_50 {dimension_numbers = #tpu.dot_dimension_numbers<[1], [0], [0], [1], [0, 0, 1, 1], [], []>} : vector<32x128xf32>, vector<128x128xf32>, vector<32x128xf32> -> vector<32x128xf32>
    %c0_51 = arith.constant 0 : index
    %c1_52 = arith.constant 1 : index
    %c0_53 = arith.constant 0 : index
    %58 = vector.load %arg10[%c0_51, %c1_52, %c0_53] : memref<2x18x128xf32, #tpu.memory_space<vmem>>, vector<2x16x128xf32>
    %59 = vector.shape_cast %58 : vector<2x16x128xf32> to vector<32x128xf32>
    %c1_54 = arith.constant 1 : index
    %c0_55 = arith.constant 0 : index
    %c0_56 = arith.constant 0 : index
    %60 = vector.load %arg2[%c1_54, %c0_55, %c0_56] : memref<3x128x128xf32, #tpu.memory_space<vmem>>, vector<1x128x128xf32>
    %61 = vector.shape_cast %60 : vector<1x128x128xf32> to vector<128x128xf32>
    %cst_57 = arith.constant dense<0.000000e+00> : vector<32x128xf32>
    %62 = tpu.matmul %59, %61, %cst_57 {dimension_numbers = #tpu.dot_dimension_numbers<[1], [0], [0], [1], [0, 0, 1, 1], [], []>} : vector<32x128xf32>, vector<128x128xf32>, vector<32x128xf32> -> vector<32x128xf32>
    %63 = arith.addf %57, %62 : vector<32x128xf32>
    %c0_58 = arith.constant 0 : index
    %c2_59 = arith.constant 2 : index
    %c0_60 = arith.constant 0 : index
    %64 = vector.load %arg10[%c0_58, %c2_59, %c0_60] : memref<2x18x128xf32, #tpu.memory_space<vmem>>, vector<2x16x128xf32>
    %65 = vector.shape_cast %64 : vector<2x16x128xf32> to vector<32x128xf32>
    %c2_61 = arith.constant 2 : index
    %c0_62 = arith.constant 0 : index
    %c0_63 = arith.constant 0 : index
    %66 = vector.load %arg2[%c2_61, %c0_62, %c0_63] : memref<3x128x128xf32, #tpu.memory_space<vmem>>, vector<1x128x128xf32>
    %67 = vector.shape_cast %66 : vector<1x128x128xf32> to vector<128x128xf32>
    %cst_64 = arith.constant dense<0.000000e+00> : vector<32x128xf32>
    %68 = tpu.matmul %65, %67, %cst_64 {dimension_numbers = #tpu.dot_dimension_numbers<[1], [0], [0], [1], [0, 0, 1, 1], [], []>} : vector<32x128xf32>, vector<128x128xf32>, vector<32x128xf32> -> vector<32x128xf32>
    %69 = arith.addf %63, %68 : vector<32x128xf32>
    %c2_65 = arith.constant 2 : index
    %c0_66 = arith.constant 0 : index
    %70 = vector.load %arg7[%c2_65, %c0_66] : memref<4x8xf32, #tpu.memory_space<vmem>>, vector<1x8xf32>
    %c3 = arith.constant 3 : index
    %c0_67 = arith.constant 0 : index
    %71 = vector.load %arg7[%c3, %c0_67] : memref<4x8xf32, #tpu.memory_space<vmem>>, vector<1x8xf32>
    %cst_68 = arith.constant dense<0.000000e+00> : vector<128xf32>
    %72 = vector.multi_reduction <add>, %69, %cst_68 [0] : vector<32x128xf32> to vector<128xf32>
    %73 = vector.shape_cast %72 : vector<128xf32> to vector<1x128xf32>
    %74 = arith.mulf %69, %69 : vector<32x128xf32>
    %cst_69 = arith.constant dense<0.000000e+00> : vector<128xf32>
    %75 = vector.multi_reduction <add>, %74, %cst_69 [0] : vector<32x128xf32> to vector<128xf32>
    %76 = vector.shape_cast %75 : vector<128xf32> to vector<1x128xf32>
    %cst_70 = arith.constant dense<0.000000e+00> : vector<1x8xf32>
    %77 = tpu.matmul %73, %0, %cst_70 {dimension_numbers = #tpu.dot_dimension_numbers<[1], [0], [0], [1], [0, 0, 1, 1], [], []>} : vector<1x128xf32>, vector<128x8xf32>, vector<1x8xf32> -> vector<1x8xf32>
    %cst_71 = arith.constant 0.001953125 : f32
    %78 = vector.broadcast %cst_71 : f32 to vector<1x8xf32>
    %79 = arith.mulf %77, %78 : vector<1x8xf32>
    %cst_72 = arith.constant dense<0.000000e+00> : vector<1x8xf32>
    %80 = tpu.matmul %76, %0, %cst_72 {dimension_numbers = #tpu.dot_dimension_numbers<[1], [0], [0], [1], [0, 0, 1, 1], [], []>} : vector<1x128xf32>, vector<128x8xf32>, vector<1x8xf32> -> vector<1x8xf32>
    %cst_73 = arith.constant 0.001953125 : f32
    %81 = vector.broadcast %cst_73 : f32 to vector<1x8xf32>
    %82 = arith.mulf %80, %81 : vector<1x8xf32>
    %83 = arith.mulf %79, %79 : vector<1x8xf32>
    %84 = arith.subf %82, %83 : vector<1x8xf32>
    %cst_74 = arith.constant 0.000000e+00 : f32
    %85 = vector.broadcast %cst_74 : f32 to vector<1x8xf32>
    %86 = arith.maximumf %84, %85 : vector<1x8xf32>
    %cst_75 = arith.constant 9.99999974E-6 : f32
    %87 = vector.broadcast %cst_75 : f32 to vector<1x8xf32>
    %88 = arith.addf %86, %87 : vector<1x8xf32>
    %89 = math.rsqrt %88 : vector<1x8xf32>
    %90 = arith.mulf %70, %89 : vector<1x8xf32>
    %91 = arith.mulf %79, %90 : vector<1x8xf32>
    %92 = arith.subf %71, %91 : vector<1x8xf32>
    %cst_76 = arith.constant dense<0.000000e+00> : vector<1x128xf32>
    %93 = tpu.matmul %90, %1, %cst_76 {dimension_numbers = #tpu.dot_dimension_numbers<[1], [0], [0], [1], [0, 0, 1, 1], [], []>} : vector<1x8xf32>, vector<8x128xf32>, vector<1x128xf32> -> vector<1x128xf32>
    %cst_77 = arith.constant dense<0.000000e+00> : vector<1x128xf32>
    %94 = tpu.matmul %92, %1, %cst_77 {dimension_numbers = #tpu.dot_dimension_numbers<[1], [0], [0], [1], [0, 0, 1, 1], [], []>} : vector<1x8xf32>, vector<8x128xf32>, vector<1x128xf32> -> vector<1x128xf32>
    %95 = vector.broadcast %93 : vector<1x128xf32> to vector<32x128xf32>
    %96 = arith.mulf %69, %95 : vector<32x128xf32>
    %97 = vector.broadcast %94 : vector<1x128xf32> to vector<32x128xf32>
    %98 = arith.addf %96, %97 : vector<32x128xf32>
    %c0_78 = arith.constant 0 : index
    %c0_79 = arith.constant 0 : index
    %99 = memref.load %arg8[%c0_78, %c0_79] : memref<1x1xf32, #tpu.memory_space<smem>>
    %cst_80 = arith.constant 0.000000e+00 : f32
    %100 = vector.broadcast %cst_80 : f32 to vector<32x128xf32>
    %101 = arith.maximumf %98, %100 : vector<32x128xf32>
    %cst_81 = arith.constant 0.000000e+00 : f32
    %102 = vector.broadcast %cst_81 : f32 to vector<32x128xf32>
    %103 = arith.minimumf %98, %102 : vector<32x128xf32>
    %104 = vector.broadcast %99 : f32 to vector<32x128xf32>
    %105 = arith.mulf %104, %103 : vector<32x128xf32>
    %106 = arith.addf %101, %105 : vector<32x128xf32>
    %c0_82 = arith.constant 0 : index
    %c0_83 = arith.constant 0 : index
    %107 = vector.load %arg5[%c0_82, %c0_83] : memref<128x256xf32, #tpu.memory_space<vmem>>, vector<128x256xf32>
    %c0_84 = arith.constant 0 : index
    %c0_85 = arith.constant 0 : index
    %108 = vector.load %arg6[%c0_84, %c0_85] : memref<32x16xf32, #tpu.memory_space<vmem>>, vector<32x16xf32>
    %109 = vector.extract_strided_slice %106 {offsets = [0, 0], sizes = [16, 128], strides = [1, 1]} : vector<32x128xf32> to vector<16x128xf32>
    %cst_86 = arith.constant dense<0.000000e+00> : vector<16x256xf32>
    %110 = tpu.matmul %109, %107, %cst_86 {dimension_numbers = #tpu.dot_dimension_numbers<[1], [0], [0], [1], [0, 0, 1, 1], [], []>} : vector<16x128xf32>, vector<128x256xf32>, vector<16x256xf32> -> vector<16x256xf32>
    %cst_87 = arith.constant dense<0.000000e+00> : vector<32x256xf32>
    %111 = tpu.matmul %108, %110, %cst_87 {dimension_numbers = #tpu.dot_dimension_numbers<[1], [0], [0], [1], [0, 0, 1, 1], [], []>} : vector<32x16xf32>, vector<16x256xf32>, vector<32x256xf32> -> vector<32x256xf32>
    %c0_88 = arith.constant 0 : index
    %c0_89 = arith.constant 0 : index
    %c0_90 = arith.constant 0 : index
    %112 = vector.load %arg9[%c0_88, %c0_89, %c0_90] : memref<2x32x256xf32, #tpu.memory_space<vmem>>, vector<1x32x256xf32>
    %113 = vector.shape_cast %112 : vector<1x32x256xf32> to vector<32x256xf32>
    %114 = vector.shape_cast %111 : vector<32x256xf32> to vector<1x32x256xf32>
    tpu.vector_store %arg9[%c0_88, %c0_89, %c0_90], %114 {strides = array<i32>} : memref<2x32x256xf32, #tpu.memory_space<vmem>>, vector<1x32x256xf32>,
    %115 = vector.extract_strided_slice %106 {offsets = [16, 0], sizes = [16, 128], strides = [1, 1]} : vector<32x128xf32> to vector<16x128xf32>
    %cst_91 = arith.constant dense<0.000000e+00> : vector<16x256xf32>
    %116 = tpu.matmul %115, %107, %cst_91 {dimension_numbers = #tpu.dot_dimension_numbers<[1], [0], [0], [1], [0, 0, 1, 1], [], []>} : vector<16x128xf32>, vector<128x256xf32>, vector<16x256xf32> -> vector<16x256xf32>
    %cst_92 = arith.constant dense<0.000000e+00> : vector<32x256xf32>
    %117 = tpu.matmul %108, %116, %cst_92 {dimension_numbers = #tpu.dot_dimension_numbers<[1], [0], [0], [1], [0, 0, 1, 1], [], []>} : vector<32x16xf32>, vector<16x256xf32>, vector<32x256xf32> -> vector<32x256xf32>
    %c1_93 = arith.constant 1 : index
    %c0_94 = arith.constant 0 : index
    %c0_95 = arith.constant 0 : index
    %118 = vector.load %arg9[%c1_93, %c0_94, %c0_95] : memref<2x32x256xf32, #tpu.memory_space<vmem>>, vector<1x32x256xf32>
    %119 = vector.shape_cast %118 : vector<1x32x256xf32> to vector<32x256xf32>
    %120 = vector.shape_cast %117 : vector<32x256xf32> to vector<1x32x256xf32>
    tpu.vector_store %arg9[%c1_93, %c0_94, %c0_95], %120 {strides = array<i32>} : memref<2x32x256xf32, #tpu.memory_space<vmem>>, vector<1x32x256xf32>,
    return
  }
}

</mosaic_0001>

<llo_original>
// kernel: tile.9
$region0: #{tile.9}
  %s0 = inlined_call_operand.vmem [shape: f32[16,8,8], index: 0, kind: input, shape index: {}]
  %s1 = inlined_call_operand.vmem [shape: f32[128,8], index: 1, kind: output, shape index: {}]
  %s2 = smov 3
  %v3 = vld [vmem:[%s0] ss:$16 sm:%s2]
  %s4 = smov 12
  %v5 = vld [vmem:[%s0] ss:$16 sm:%s4]
  %vm6 = vcmask 1043458
  %v7 = vsel %vm6, %v5, %v3
  %s8 = smov 48
  %v9 = vld [vmem:[%s0] ss:$16 sm:%s8]
  %vm10 = vcmask 1045508
  %v11 = vsel %vm10, %v9, %v7
  %s12 = smov 192
  %v13 = vld [vmem:[%s0] ss:$16 sm:%s12]
  %vm14 = vcmask 1047558
  %v15 = vsel %vm14, %v13, %v11
  %vm16 = vcmask 64512
  %17 = vst.msk [vmem:[%s1] sm:$0xff] %vm16, %v15
  %s18 = scalar_lea.vmem %s0, 15
  %s19 = smov 3
  %v20 = vld [vmem:[%s18] ss:$16 sm:%s19]
  %s21 = scalar_lea.vmem %s0, 15
  %s22 = smov 12
  %v23 = vld [vmem:[%s21] ss:$16 sm:%s22]
  %vm24 = vcmask 1043458
  %v25 = vsel %vm24, %v23, %v20
  %s26 = scalar_lea.vmem %s0, 15
  %s27 = smov 48
  %v28 = vld [vmem:[%s26] ss:$16 sm:%s27]
  %vm29 = vcmask 1045508
  %v30 = vsel %vm29, %v28, %v25
  %s31 = scalar_lea.vmem %s0, 15
  %s32 = smov 192
  %v33 = vld [vmem:[%s31] ss:$16 sm:%s32]
  %vm34 = vcmask 1047558
  %v35 = vsel %vm34, %v33, %v30
  %36 = vrot.lane.b32.xlu0 %v35, 120
  %v37 = vpop.permute.xlu0 %36
  %vm38 = vcmask 1048512
  %39 = vst.msk [vmem:[%s1] sm:$0xff] %vm38, %v37
  %s40 = scalar_lea.vmem %s0, 14
  %s41 = smov 3
  %v42 = vld [vmem:[%s40] ss:$16 sm:%s41]
  %s43 = scalar_lea.vmem %s0, 14
  %s44 = smov 12
  %v45 = vld [vmem:[%s43] ss:$16 sm:%s44]
  %vm46 = vcmask 1043458
  %v47 = vsel %vm46, %v45, %v42
  %s48 = scalar_lea.vmem %s0, 14
  %s49 = smov 48
  %v50 = vld [vmem:[%s48] ss:$16 sm:%s49]
  %vm51 = vcmask 1045508
  %v52 = vsel %vm51, %v50, %v47
  %s53 = scalar_lea.vmem %s0, 14
  %s54 = smov 192
  %v55 = vld [vmem:[%s53] ss:$16 sm:%s54]
  %vm56 = vcmask 1047558
  %v57 = vsel %vm56, %v55, %v52
  %58 = vrot.lane.b32.xlu0 %v57, 112
  %v59 = vpop.permute.xlu0 %58
  %vm60 = vcmask 982912
  %61 = vst.msk [vmem:[%s1] sm:$0xff] %vm60, %v59
  %s62 = scalar_lea.vmem %s0, 13
  %s63 = smov 3
  %v64 = vld [vmem:[%s62] ss:$16 sm:%s63]
  %s65 = scalar_lea.vmem %s0, 13
  %s66 = smov 12
  %v67 = vld [vmem:[%s65] ss:$16 sm:%s66]
  %vm68 = vcmask 1043458
  %v69 = vsel %vm68, %v67, %v64
  %s70 = scalar_lea.vmem %s0, 13
  %s71 = smov 48
  %v72 = vld [vmem:[%s70] ss:$16 sm:%s71]
  %vm73 = vcmask 1045508
  %v74 = vsel %vm73, %v72, %v69
  %s75 = scalar_lea.vmem %s0, 13
  %s76 = smov 192
  %v77 = vld [vmem:[%s75] ss:$16 sm:%s76]
  %vm78 = vcmask 1047558
  %v79 = vsel %vm78, %v77, %v74
  %80 = vrot.lane.b32.xlu0 %v79, 104
  %v81 = vpop.permute.xlu0 %80
  %vm82 = vcmask 917312
  %83 = vst.msk [vmem:[%s1] sm:$0xff] %vm82, %v81
  %s84 = scalar_lea.vmem %s0, 12
  %s85 = smov 3
  %v86 = vld [vmem:[%s84] ss:$16 sm:%s85]
  %s87 = scalar_lea.vmem %s0, 12
  %s88 = smov 12
  %v89 = vld [vmem:[%s87] ss:$16 sm:%s88]
  %vm90 = vcmask 1043458
  %v91 = vsel %vm90, %v89, %v86
  %s92 = scalar_lea.vmem %s0, 12
  %s93 = smov 48
  %v94 = vld [vmem:[%s92] ss:$16 sm:%s93]
  %vm95 = vcmask 1045508
  %v96 = vsel %vm95, %v94, %v91
  %s97 = scalar_lea.vmem %s0, 12
  %s98 = smov 192
  %v99 = vld [vmem:[%s97] ss:$16 sm:%s98]
  %vm100 = vcmask 1047558
  %v101 = vsel %vm100, %v99, %v96
  %102 = vrot.lane.b32.xlu0 %v101, 96
  %v103 = vpop.permute.xlu0 %102
  %vm104 = vcmask 851712
  %105 = vst.msk [vmem:[%s1] sm:$0xff] %vm104, %v103
  %s106 = scalar_lea.vmem %s0, 11
  %s107 = smov 3
  %v108 = vld [vmem:[%s106] ss:$16 sm:%s107]
  %s109 = scalar_lea.vmem %s0, 11
  %s110 = smov 12
  %v111 = vld [vmem:[%s109] ss:$16 sm:%s110]
  %vm112 = vcmask 1043458
  %v113 = vsel %vm112, %v111, %v108
  %s114 = scalar_lea.vmem %s0, 11
  %s115 = smov 48
  %v116 = vld [vmem:[%s114] ss:$16 sm:%s115]
  %vm117 = vcmask 1045508
  %v118 = vsel %vm117, %v116, %v113
  %s119 = scalar_lea.vmem %s0, 11
  %s120 = smov 192
  %v121 = vld [vmem:[%s119] ss:$16 sm:%s120]
  %vm122 = vcmask 1047558
  %v123 = vsel %vm122, %v121, %v118
  %124 = vrot.lane.b32.xlu0 %v123, 88
  %v125 = vpop.permute.xlu0 %124
  %vm126 = vcmask 786112
  %127 = vst.msk [vmem:[%s1] sm:$0xff] %vm126, %v125
  %s128 = scalar_lea.vmem %s0, 10
  %s129 = smov 3
  %v130 = vld [vmem:[%s128] ss:$16 sm:%s129]
  %s131 = scalar_lea.vmem %s0, 10
  %s132 = smov 12
  %v133 = vld [vmem:[%s131] ss:$16 sm:%s132]
  %vm134 = vcmask 1043458
  %v135 = vsel %vm134, %v133, %v130
  %s136 = scalar_lea.vmem %s0, 10
  %s137 = smov 48
  %v138 = vld [vmem:[%s136] ss:$16 sm:%s137]
  %vm139 = vcmask 1045508
  %v140 = vsel %vm139, %v138, %v135
  %s141 = scalar_lea.vmem %s0, 10
  %s142 = smov 192
  %v143 = vld [vmem:[%s141] ss:$16 sm:%s142]
  %vm144 = vcmask 1047558
  %v145 = vsel %vm144, %v143, %v140
  %146 = vrot.lane.b32.xlu0 %v145, 80
  %v147 = vpop.permute.xlu0 %146
  %vm148 = vcmask 720512
  %149 = vst.msk [vmem:[%s1] sm:$0xff] %vm148, %v147
  %s150 = scalar_lea.vmem %s0, 9
  %s151 = smov 3
  %v152 = vld [vmem:[%s150] ss:$16 sm:%s151]
  %s153 = scalar_lea.vmem %s0, 9
  %s154 = smov 12
  %v155 = vld [vmem:[%s153] ss:$16 sm:%s154]
  %vm156 = vcmask 1043458
  %v157 = vsel %vm156, %v155, %v152
  %s158 = scalar_lea.vmem %s0, 9
  %s159 = smov 48
  %v160 = vld [vmem:[%s158] ss:$16 sm:%s159]
  %vm161 = vcmask 1045508
  %v162 = vsel %vm161, %v160, %v157
  %s163 = scalar_lea.vmem %s0, 9
  %s164 = smov 192
  %v165 = vld [vmem:[%s163] ss:$16 sm:%s164]
  %vm166 = vcmask 1047558
  %v167 = vsel %vm166, %v165, %v162
  %168 = vrot.lane.b32.xlu0 %v167, 72
  %v169 = vpop.permute.xlu0 %168
  %vm170 = vcmask 654912
  %171 = vst.msk [vmem:[%s1] sm:$0xff] %vm170, %v169
  %s172 = scalar_lea.vmem %s0, 8
  %s173 = smov 3
  %v174 = vld [vmem:[%s172] ss:$16 sm:%s173]
  %s175 = scalar_lea.vmem %s0, 8
  %s176 = smov 12
  %v177 = vld [vmem:[%s175] ss:$16 sm:%s176]
  %vm178 = vcmask 1043458
  %v179 = vsel %vm178, %v177, %v174
  %s180 = scalar_lea.vmem %s0, 8
  %s181 = smov 48
  %v182 = vld [vmem:[%s180] ss:$16 sm:%s181]
  %vm183 = vcmask 1045508
  %v184 = vsel %vm183, %v182, %v179
  %s185 = scalar_lea.vmem %s0, 8
  %s186 = smov 192
  %v187 = vld [vmem:[%s185] ss:$16 sm:%s186]
  %vm188 = vcmask 1047558
  %v189 = vsel %vm188, %v187, %v184
  %190 = vrot.lane.b32.xlu0 %v189, 64
  %v191 = vpop.permute.xlu0 %190
  %vm192 = vcmask 589312
  %193 = vst.msk [vmem:[%s1] sm:$0xff] %vm192, %v191
  %s194 = scalar_lea.vmem %s0, 7
  %s195 = smov 3
  %v196 = vld [vmem:[%s194] ss:$16 sm:%s195]
  %s197 = scalar_lea.vmem %s0, 7
  %s198 = smov 12
  %v199 = vld [vmem:[%s197] ss:$16 sm:%s198]
  %vm200 = vcmask 1043458
  %v201 = vsel %vm200, %v199, %v196
  %s202 = scalar_lea.vmem %s0, 7
  %s203 = smov 48
  %v204 = vld [vmem:[%s202] ss:$16 sm:%s203]
  %vm205 = vcmask 1045508
  %v206 = vsel %vm205, %v204, %v201
  %s207 = scalar_lea.vmem %s0, 7
  %s208 = smov 192
  %v209 = vld [vmem:[%s207] ss:$16 sm:%s208]
  %vm210 = vcmask 1047558
  %v211 = vsel %vm210, %v209, %v206
  %212 = vrot.lane.b32.xlu0 %v211, 56
  %v213 = vpop.permute.xlu0 %212
  %vm214 = vcmask 523712
  %215 = vst.msk [vmem:[%s1] sm:$0xff] %vm214, %v213
  %s216 = scalar_lea.vmem %s0, 6
  %s217 = smov 3
  %v218 = vld [vmem:[%s216] ss:$16 sm:%s217]
  %s219 = scalar_lea.vmem %s0, 6
  %s220 = smov 12
  %v221 = vld [vmem:[%s219] ss:$16 sm:%s220]
  %vm222 = vcmask 1043458
  %v223 = vsel %vm222, %v221, %v218
  %s224 = scalar_lea.vmem %s0, 6
  %s225 = smov 48
  %v226 = vld [vmem:[%s224] ss:$16 sm:%s225]
  %vm227 = vcmask 1045508
  %v228 = vsel %vm227, %v226, %v223
  %s229 = scalar_lea.vmem %s0, 6
  %s230 = smov 192
  %v231 = vld [vmem:[%s229] ss:$16 sm:%s230]
  %vm232 = vcmask 1047558
  %v233 = vsel %vm232, %v231, %v228
  %234 = vrot.lane.b32.xlu0 %v233, 48
  %v235 = vpop.permute.xlu0 %234
  %vm236 = vcmask 458112
  %237 = vst.msk [vmem:[%s1] sm:$0xff] %vm236, %v235
  %s238 = scalar_lea.vmem %s0, 5
  %s239 = smov 3
  %v240 = vld [vmem:[%s238] ss:$16 sm:%s239]
  %s241 = scalar_lea.vmem %s0, 5
  %s242 = smov 12
  %v243 = vld [vmem:[%s241] ss:$16 sm:%s242]
  %vm244 = vcmask 1043458
  %v245 = vsel %vm244, %v243, %v240
  %s246 = scalar_lea.vmem %s0, 5
  %s247 = smov 48
  %v248 = vld [vmem:[%s246] ss:$16 sm:%s247]
  %vm249 = vcmask 1045508
  %v250 = vsel %vm249, %v248, %v245
  %s251 = scalar_lea.vmem %s0, 5
  %s252 = smov 192
  %v253 = vld [vmem:[%s251] ss:$16 sm:%s252]
  %vm254 = vcmask 1047558
  %v255 = vsel %vm254, %v253, %v250
  %256 = vrot.lane.b32.xlu0 %v255, 40
  %v257 = vpop.permute.xlu0 %256
  %vm258 = vcmask 392512
  %259 = vst.msk [vmem:[%s1] sm:$0xff] %vm258, %v257
  %s260 = scalar_lea.vmem %s0, 4
  %s261 = smov 3
  %v262 = vld [vmem:[%s260] ss:$16 sm:%s261]
  %s263 = scalar_lea.vmem %s0, 4
  %s264 = smov 12
  %v265 = vld [vmem:[%s263] ss:$16 sm:%s264]
  %vm266 = vcmask 1043458
  %v267 = vsel %vm266, %v265, %v262
  %s268 = scalar_lea.vmem %s0, 4
  %s269 = smov 48
  %v270 = vld [vmem:[%s268] ss:$16 sm:%s269]
  %vm271 = vcmask 1045508
  %v272 = vsel %vm271, %v270, %v267
  %s273 = scalar_lea.vmem %s0, 4
  %s274 = smov 192
  %v275 = vld [vmem:[%s273] ss:$16 sm:%s274]
  %vm276 = vcmask 1047558
  %v277 = vsel %vm276, %v275, %v272
  %278 = vrot.lane.b32.xlu0 %v277, 32
  %v279 = vpop.permute.xlu0 %278
  %vm280 = vcmask 326912
  %281 = vst.msk [vmem:[%s1] sm:$0xff] %vm280, %v279
  %s282 = scalar_lea.vmem %s0, 3
  %s283 = smov 3
  %v284 = vld [vmem:[%s282] ss:$16 sm:%s283]
  %s285 = scalar_lea.vmem %s0, 3
  %s286 = smov 12
  %v287 = vld [vmem:[%s285] ss:$16 sm:%s286]
  %vm288 = vcmask 1043458
  %v289 = vsel %vm288, %v287, %v284
  %s290 = scalar_lea.vmem %s0, 3
  %s291 = smov 48
  %v292 = vld [vmem:[%s290] ss:$16 sm:%s291]
  %vm293 = vcmask 1045508
  %v294 = vsel %vm293, %v292, %v289
  %s295 = scalar_lea.vmem %s0, 3
  %s296 = smov 192
  %v297 = vld [vmem:[%s295] ss:$16 sm:%s296]
  %vm298 = vcmask 1047558
  %v299 = vsel %vm298, %v297, %v294
  %300 = vrot.lane.b32.xlu0 %v299, 24
  %v301 = vpop.permute.xlu0 %300
  %vm302 = vcmask 261312
  %303 = vst.msk [vmem:[%s1] sm:$0xff] %vm302, %v301
  %s304 = scalar_lea.vmem %s0, 2
  %s305 = smov 3
  %v306 = vld [vmem:[%s304] ss:$16 sm:%s305]
  %s307 = scalar_lea.vmem %s0, 2
  %s308 = smov 12
  %v309 = vld [vmem:[%s307] ss:$16 sm:%s308]
  %vm310 = vcmask 1043458
  %v311 = vsel %vm310, %v309, %v306
  %s312 = scalar_lea.vmem %s0, 2
  %s313 = smov 48
  %v314 = vld [vmem:[%s312] ss:$16 sm:%s313]
  %vm315 = vcmask 1045508
  %v316 = vsel %vm315, %v314, %v311
  %s317 = scalar_lea.vmem %s0, 2
  %s318 = smov 192
  %v319 = vld [vmem:[%s317] ss:$16 sm:%s318]
  %vm320 = vcmask 1047558
  %v321 = vsel %vm320, %v319, %v316
  %322 = vrot.lane.b32.xlu0 %v321, 16
  %v323 = vpop.permute.xlu0 %322
  %vm324 = vcmask 195712
  %325 = vst.msk [vmem:[%s1] sm:$0xff] %vm324, %v323
  %s326 = scalar_lea.vmem %s0, 1
  %s327 = smov 3
  %v328 = vld [vmem:[%s326] ss:$16 sm:%s327]
  %s329 = scalar_lea.vmem %s0, 1
  %s330 = smov 12
  %v331 = vld [vmem:[%s329] ss:$16 sm:%s330]
  %vm332 = vcmask 1043458
  %v333 = vsel %vm332, %v331, %v328
  %s334 = scalar_lea.vmem %s0, 1
  %s335 = smov 48
  %v336 = vld [vmem:[%s334] ss:$16 sm:%s335]
  %vm337 = vcmask 1045508
  %v338 = vsel %vm337, %v336, %v333
  %s339 = scalar_lea.vmem %s0, 1
  %s340 = smov 192
  %v341 = vld [vmem:[%s339] ss:$16 sm:%s340]
  %vm342 = vcmask 1047558
  %v343 = vsel %vm342, %v341, %v338
  %344 = vrot.lane.b32.xlu0 %v343, 8
  %v345 = vpop.permute.xlu0 %344
  %vm346 = vcmask 130112
  %347 = vst.msk [vmem:[%s1] sm:$0xff] %vm346, %v345

// kernel: upblock_forward.1
$region0: #{upblock_forward.1}
  #allocation0 [shape = 'u32[]', space=smem, size = 0x4, offset = 0x4, fixed_abs, tag = 'smem constant byte address 0x4 - core index']
  #allocation1 [shape = 'u32[144,128]{1,0:T(1,128)}', space=vmem, size = 0x12000, scoped, tag = 'internal scratch']
  #allocation2 [shape = 'f32[2,18,128]{2,1,0:T(8,128)}', space=vmem, size = 0x6000, scoped, tag = 'scratch operand']
  #allocation3 [shape = 'f32[1,1]{1,0:T(1,128)S(6)}', space=smem, size = 0x200, scoped, tag = 'scoped memory for upblock_forward.1']
  %s0 = inlined_call_operand.vmem [shape: f32[2,18,64], index: 0, kind: input, shape index: {}]
  %s1 = inlined_call_operand.vmem [shape: f32[3,64,128], index: 1, kind: input, shape index: {}]
  %s2 = inlined_call_operand.vmem [shape: f32[3,128,128], index: 2, kind: input, shape index: {}]
  %s3 = inlined_call_operand.vmem [shape: f32[128,8], index: 3, kind: input, shape index: {}]
  %s4 = inlined_call_operand.vmem [shape: f32[8,128], index: 4, kind: input, shape index: {}]
  %s5 = inlined_call_operand.vmem [shape: f32[128,256], index: 5, kind: input, shape index: {}]
  %s6 = inlined_call_operand.vmem [shape: f32[32,16], index: 6, kind: input, shape index: {}]
  %s7 = inlined_call_operand.vmem [shape: f32[4,8], index: 7, kind: input, shape index: {}]
  %s8 = inlined_call_operand.<no memory space> [shape: f32[1,1], index: 8, kind: input, shape index: {}]
  %s9 = inlined_call_operand.vmem [shape: f32[2,32,256], index: 9, kind: output, shape index: {}]
  %s10 = sld [smem:[#allocation0]]
  $region46: #{upblock_forward.1} parent=0
    _
  %s12 = ssub.s32 1, %s10
  %s13 = scalar_select 0, %s12, %s10
  %14 = sst [smem:[#allocation3]] %s8
  // Predicated region
  $region2: #{upblock_forward.1} parent=0 // pred_check
    _
  $region3: #{upblock_forward.1} parent=0 // pred_check_branch
    %16 = sbr.rel (0) target = $region5
  $region4: #{upblock_forward.1} parent=0 // pred_region
    _
  $region5: #{upblock_forward.1} parent=0 // pred_fallthru
    _
  // Predicated region
  $region6: #{upblock_forward.1} parent=0 // pred_check
    _
  $region7: #{upblock_forward.1} parent=0 // pred_check_branch
    %18 = sbr.rel (0) target = $region9
  $region8: #{upblock_forward.1} parent=0 // pred_region
    _
  $region9: #{upblock_forward.1} parent=0 // pred_fallthru
    _
  // Predicated region
  $region10: #{upblock_forward.1} parent=0 // pred_check
    _
  $region11: #{upblock_forward.1} parent=0 // pred_check_branch
    %20 = sbr.rel (0) target = $region13
  $region12: #{upblock_forward.1} parent=0 // pred_region
    _
  $region13: #{upblock_forward.1} parent=0 // pred_fallthru
    _
  // Predicated region
  $region14: #{upblock_forward.1} parent=0 // pred_check
    _
  $region15: #{upblock_forward.1} parent=0 // pred_check_branch
    %22 = sbr.rel (0) target = $region17
  $region16: #{upblock_forward.1} parent=0 // pred_region
    _
  $region17: #{upblock_forward.1} parent=0 // pred_fallthru
    _
  // Predicated region
  $region18: #{upblock_forward.1} parent=0 // pred_check
    _
  $region19: #{upblock_forward.1} parent=0 // pred_check_branch
    %24 = sbr.rel (0) target = $region21
  $region20: #{upblock_forward.1} parent=0 // pred_region
    _
  $region21: #{upblock_forward.1} parent=0 // pred_fallthru
    _
  // Predicated region
  $region22: #{upblock_forward.1} parent=0 // pred_check
    _
  $region23: #{upblock_forward.1} parent=0 // pred_check_branch
    %26 = sbr.rel (0) target = $region25
  $region24: #{upblock_forward.1} parent=0 // pred_region
    _
  $region25: #{upblock_forward.1} parent=0 // pred_fallthru
    _
  // Predicated region
  $region26: #{upblock_forward.1} parent=0 // pred_check
    _
  $region27: #{upblock_forward.1} parent=0 // pred_check_branch
    %28 = sbr.rel (0) target = $region29
  $region28: #{upblock_forward.1} parent=0 // pred_region
    _
  $region29: #{upblock_forward.1} parent=0 // pred_fallthru
    _
  // Predicated region
  $region30: #{upblock_forward.1} parent=0 // pred_check
    _
  $region31: #{upblock_forward.1} parent=0 // pred_check_branch
    %30 = sbr.rel (0) target = $region33
  $region32: #{upblock_forward.1} parent=0 // pred_region
    _
  $region33: #{upblock_forward.1} parent=0 // pred_fallthru
    _
  // Predicated region
  $region34: #{upblock_forward.1} parent=0 // pred_check
    _
  $region35: #{upblock_forward.1} parent=0 // pred_check_branch
    %32 = sbr.rel (0) target = $region37
  $region36: #{upblock_forward.1} parent=0 // pred_region
    _
  $region37: #{upblock_forward.1} parent=0 // pred_fallthru
    _
  %v33 = vld [vmem:[%s3] sm:$0xff]
  %v34 = vld [vmem:[%s3 + $0x8] sm:$0xff]
  %v35 = vld [vmem:[%s3 + $0x10] sm:$0xff]
  %v36 = vld [vmem:[%s3 + $0x18] sm:$0xff]
  %v37 = vld [vmem:[%s3 + $0x20] sm:$0xff]
  %v38 = vld [vmem:[%s3 + $0x28] sm:$0xff]
  %v39 = vld [vmem:[%s3 + $0x30] sm:$0xff]
  %v40 = vld [vmem:[%s3 + $0x38] sm:$0xff]
  %v41 = vld [vmem:[%s3 + $0x40] sm:$0xff]
  %v42 = vld [vmem:[%s3 + $0x48] sm:$0xff]
  %v43 = vld [vmem:[%s3 + $0x50] sm:$0xff]
  %v44 = vld [vmem:[%s3 + $0x58] sm:$0xff]
  %v45 = vld [vmem:[%s3 + $0x60] sm:$0xff]
  %v46 = vld [vmem:[%s3 + $0x68] sm:$0xff]
  %v47 = vld [vmem:[%s3 + $0x70] sm:$0xff]
  %v48 = vld [vmem:[%s3 + $0x78] sm:$0xff]
  %v49 = vld [vmem:[%s4] sm:$0xff]
  %v50 = vld [vmem:[%s0] sm:$0xff]
  %v51 = vld [vmem:[%s0 + $0x8] sm:$0xff]
  %v52 = vld [vmem:[%s0 + $0x18] sm:$0xff]
  %v53 = vld [vmem:[%s0 + $0x20] sm:$0xff]
  %v54 = vld [vmem:[%s1] sm:$0xff]
  %v55 = vld [vmem:[%s1 + $0x8] sm:$0xff]
  %v56 = vld [vmem:[%s1 + $0x10] sm:$0xff]
  %v57 = vld [vmem:[%s1 + $0x18] sm:$0xff]
  %v58 = vld [vmem:[%s1 + $0x20] sm:$0xff]
  %v59 = vld [vmem:[%s1 + $0x28] sm:$0xff]
  %v60 = vld [vmem:[%s1 + $0x30] sm:$0xff]
  %v61 = vld [vmem:[%s1 + $0x38] sm:$0xff]
  %v62 = vld [vmem:[%s0 + $0x1] sm:$0xff]
  %v63 = vld [vmem:[%s0 + $0x9] sm:$0xff]
  %v64 = vld [vmem:[%s0 + $0x19] sm:$0xff]
  %v65 = vld [vmem:[%s0 + $0x21] sm:$0xff]
  %s66 = scalar_lea.vmem %s1, 64
  %v67 = vld [vmem:[%s66] sm:$0xff]
  %v68 = vld [vmem:[%s66 + $0x8] sm:$0xff]
  %v69 = vld [vmem:[%s66 + $0x10] sm:$0xff]
  %v70 = vld [vmem:[%s66 + $0x18] sm:$0xff]
  %v71 = vld [vmem:[%s66 + $0x20] sm:$0xff]
  %v72 = vld [vmem:[%s66 + $0x28] sm:$0xff]
  %v73 = vld [vmem:[%s66 + $0x30] sm:$0xff]
  %v74 = vld [vmem:[%s66 + $0x38] sm:$0xff]
  %vm75 = vcmask 523264
  %v77 = vsel %vm75, %v62, 0
  %v80 = vsel %vm75, %v63, 0
  %v83 = vsel %vm75, %v64, 0
  %v86 = vsel %vm75, %v65, 0
  %88 = vmatprep.subr.mxu0 0.0
  %89 = vmatpush1.msra.mxu0 %v67
  %90 = vmatprep.subr.mxu0 0.0
  %91 = vmatpush1.msra.mxu0 %v68
  %92 = vmatprep.subr.mxu0 0.0
  %93 = vmatpush1.msra.mxu0 %v69
  %94 = vmatprep.subr.mxu0 0.0
  %95 = vmatpush1.msra.mxu0 %v70
  %96 = vmatprep.subr.mxu0 0.0
  %97 = vmatpush1.msra.mxu0 %v71
  %98 = vmatprep.subr.mxu0 0.0
  %99 = vmatpush1.msra.mxu0 %v72
  %100 = vmatprep.subr.mxu0 0.0
  %101 = vmatpush1.msra.mxu0 %v73
  %102 = vmatprep.subr.mxu0 0.0
  %103 = vmatpush1.msra.mxu0 %v74
  %104 = vmatprep.subr.mxu0 0.0
  %105 = vmatpush1.msra.mxu0 0.0
  %106 = vmatprep.subr.mxu0 0.0
  %107 = vmatpush1.msra.mxu0 0.0
  %108 = vmatprep.subr.mxu0 0.0
  %109 = vmatpush1.msra.mxu0 0.0
  %110 = vmatprep.subr.mxu0 0.0
  %111 = vmatpush1.msra.mxu0 0.0
  %112 = vmatprep.subr.mxu0 0.0
  %113 = vmatpush1.msra.mxu0 0.0
  %114 = vmatprep.subr.mxu0 0.0
  %115 = vmatpush1.msra.mxu0 0.0
  %116 = vmatprep.subr.mxu0 0.0
  %117 = vmatpush1.msra.mxu0 0.0
  %118 = vmatprep.subr.mxu0 0.0
  %119 = vmatpush1.msra.mxu0 0.0
  %120 = vmatprep.subr.mxu0 0.0
  %121 = vmatpush1.msra.mxu0 0.0
  %122 = vmatprep.subr.mxu0 0.0
  %123 = vmatpush1.msra.mxu0 0.0
  %124 = vmatprep.subr.mxu0 0.0
  %125 = vmatpush1.msra.mxu0 0.0
  %126 = vmatprep.subr.mxu0 0.0
  %127 = vmatpush1.msra.mxu0 0.0
  %128 = vmatprep.subr.mxu0 0.0
  %129 = vmatpush1.msra.mxu0 0.0
  %130 = vmatprep.subr.mxu0 0.0
  %131 = vmatpush1.msra.mxu0 0.0
  %132 = vmatprep.subr.mxu0 0.0
  %133 = vmatpush1.msra.mxu0 0.0
  %134 = vmatprep.subr.mxu0 0.0
  %135 = vmatpush1.msra.mxu0 0.0
  %136 = vmatprep.subr.mxu0 0.0
  %137 = vmatpush1.msra.mxu0 0.0
  %138 = vmatprep.subr.mxu0 0.0
  %139 = vmatpush1.msra.mxu0 0.0
  %140 = vmatprep.subr.mxu0 0.0
  %141 = vmatpush1.msra.mxu0 0.0
  %142 = vmatprep.subr.mxu0 0.0
  %143 = vmatpush1.msra.mxu0 0.0
  %144 = vmatprep.subr.mxu0 0.0
  %145 = vmatpush1.msra.mxu0 0.0
  %146 = vmatprep.subr.mxu0 0.0
  %147 = vmatpush1.msra.mxu0 0.0
  %148 = vmatprep.subr.mxu0 0.0
  %149 = vmatpush1.msra.mxu0 0.0
  %150 = vmatprep.subr.mxu0 0.0
  %151 = vmatpush1.msra.mxu0 0.0
  %152 = vmatprep.mubr.f32.mxu0 0.0
  %153 = vmatmul.mubr.f32.gmra.mrb[0].mxu0 %v77
  %v154 = vpop.f32.mrb[0].mxu0
  %v155 = vadd.f32 0.0, %v154
  %v156 = vpop.f32.mrb[0].mxu0
  %157 = vmatprep.mubr.f32.mxu0 0.0
  %158 = vmatmul.mubr.f32.gmra.mrb[0].mxu0 %v80
  %v159 = vpop.f32.mrb[0].mxu0
  %v160 = vadd.f32 0.0, %v159
  %v161 = vpop.f32.mrb[0].mxu0
  %162 = vmatprep.mubr.f32.mxu0 0.0
  %163 = vmatmul.mubr.f32.gmra.mrb[0].mxu0 %v83
  %v164 = vpop.f32.mrb[0].mxu0
  %v165 = vadd.f32 0.0, %v164
  %v166 = vpop.f32.mrb[0].mxu0
  %167 = vmatprep.mubr.f32.mxu0 0.0
  %168 = vmatmul.mubr.f32.gmra.mrb[0].mxu0 %v86
  %v169 = vpop.f32.mrb[0].mxu0
  %v170 = vadd.f32 0.0, %v169
  %v171 = vpop.f32.mrb[0].mxu0
  %172 = vdwg.mxu0
  %v174 = vsel %vm75, %v50, 0
  %v177 = vsel %vm75, %v51, 0
  %v180 = vsel %vm75, %v52, 0
  %v183 = vsel %vm75, %v53, 0
  %185 = vmatprep.subr.mxu0 0.0
  %186 = vmatpush1.msra.mxu0 %v54
  %187 = vmatprep.subr.mxu0 0.0
  %188 = vmatpush1.msra.mxu0 %v55
  %189 = vmatprep.subr.mxu0 0.0
  %190 = vmatpush1.msra.mxu0 %v56
  %191 = vmatprep.subr.mxu0 0.0
  %192 = vmatpush1.msra.mxu0 %v57
  %193 = vmatprep.subr.mxu0 0.0
  %194 = vmatpush1.msra.mxu0 %v58
  %195 = vmatprep.subr.mxu0 0.0
  %196 = vmatpush1.msra.mxu0 %v59
  %197 = vmatprep.subr.mxu0 0.0
  %198 = vmatpush1.msra.mxu0 %v60
  %199 = vmatprep.subr.mxu0 0.0
  %200 = vmatpush1.msra.mxu0 %v61
  %201 = vmatprep.subr.mxu0 0.0
  %202 = vmatpush1.msra.mxu0 0.0
  %203 = vmatprep.subr.mxu0 0.0
  %204 = vmatpush1.msra.mxu0 0.0
  %205 = vmatprep.subr.mxu0 0.0
  %206 = vmatpush1.msra.mxu0 0.0
  %207 = vmatprep.subr.mxu0 0.0
  %208 = vmatpush1.msra.mxu0 0.0
  %209 = vmatprep.subr.mxu0 0.0
  %210 = vmatpush1.msra.mxu0 0.0
  %211 = vmatprep.subr.mxu0 0.0
  %212 = vmatpush1.msra.mxu0 0.0
  %213 = vmatprep.subr.mxu0 0.0
  %214 = vmatpush1.msra.mxu0 0.0
  %215 = vmatprep.subr.mxu0 0.0
  %216 = vmatpush1.msra.mxu0 0.0
  %217 = vmatprep.subr.mxu0 0.0
  %218 = vmatpush1.msra.mxu0 0.0
  %219 = vmatprep.subr.mxu0 0.0
  %220 = vmatpush1.msra.mxu0 0.0
  %221 = vmatprep.subr.mxu0 0.0
  %222 = vmatpush1.msra.mxu0 0.0
  %223 = vmatprep.subr.mxu0 0.0
  %224 = vmatpush1.msra.mxu0 0.0
  %225 = vmatprep.subr.mxu0 0.0
  %226 = vmatpush1.msra.mxu0 0.0
  %227 = vmatprep.subr.mxu0 0.0
  %228 = vmatpush1.msra.mxu0 0.0
  %229 = vmatprep.subr.mxu0 0.0
  %230 = vmatpush1.msra.mxu0 0.0
  %231 = vmatprep.subr.mxu0 0.0
  %232 = vmatpush1.msra.mxu0 0.0
  %233 = vmatprep.subr.mxu0 0.0
  %234 = vmatpush1.msra.mxu0 0.0
  %235 = vmatprep.subr.mxu0 0.0
  %236 = vmatpush1.msra.mxu0 0.0
  %237 = vmatprep.subr.mxu0 0.0
  %238 = vmatpush1.msra.mxu0 0.0
  %239 = vmatprep.subr.mxu0 0.0
  %240 = vmatpush1.msra.mxu0 0.0
  %241 = vmatprep.subr.mxu0 0.0
  %242 = vmatpush1.msra.mxu0 0.0
  %243 = vmatprep.subr.mxu0 0.0
  %244 = vmatpush1.msra.mxu0 0.0
  %245 = vmatprep.subr.mxu0 0.0
  %246 = vmatpush1.msra.mxu0 0.0
  %247 = vmatprep.subr.mxu0 0.0
  %248 = vmatpush1.msra.mxu0 0.0
  %249 = vmatprep.mubr.f32.mxu0 0.0
  %250 = vmatmul.mubr.f32.gmra.mrb[0].mxu0 %v174
  %v251 = vpop.f32.mrb[0].mxu0
  %v252 = vadd.f32 %v155, %v251
  %v253 = vpop.f32.mrb[0].mxu0
  %254 = vmatprep.mubr.f32.mxu0 0.0
  %255 = vmatmul.mubr.f32.gmra.mrb[0].mxu0 %v177
  %v256 = vpop.f32.mrb[0].mxu0
  %v257 = vadd.f32 %v160, %v256
  %v258 = vpop.f32.mrb[0].mxu0
  %259 = vmatprep.mubr.f32.mxu0 0.0
  %260 = vmatmul.mubr.f32.gmra.mrb[0].mxu0 %v180
  %v261 = vpop.f32.mrb[0].mxu0
  %v262 = vadd.f32 %v165, %v261
  %v263 = vpop.f32.mrb[0].mxu0
  %264 = vmatprep.mubr.f32.mxu0 0.0
  %265 = vmatmul.mubr.f32.gmra.mrb[0].mxu0 %v183
  %v266 = vpop.f32.mrb[0].mxu0
  %v267 = vadd.f32 %v170, %v266
  %v268 = vpop.f32.mrb[0].mxu0
  %269 = vdwg.mxu0
  %v270 = vld [vmem:[%s0 + $0x2] sm:$0xff]
  %v271 = vld [vmem:[%s0 + $0xa] sm:$0xff]
  %v272 = vld [vmem:[%s0 + $0x1a] sm:$0xff]
  %v273 = vld [vmem:[%s0 + $0x22] sm:$0xff]
  %s274 = scalar_lea.vmem %s1, 128
  %v275 = vld [vmem:[%s274] sm:$0xff]
  %v276 = vld [vmem:[%s274 + $0x8] sm:$0xff]
  %v277 = vld [vmem:[%s274 + $0x10] sm:$0xff]
  %v278 = vld [vmem:[%s274 + $0x18] sm:$0xff]
  %v279 = vld [vmem:[%s274 + $0x20] sm:$0xff]
  %v280 = vld [vmem:[%s274 + $0x28] sm:$0xff]
  %v281 = vld [vmem:[%s274 + $0x30] sm:$0xff]
  %v282 = vld [vmem:[%s274 + $0x38] sm:$0xff]
  %v284 = vsel %vm75, %v270, 0
  %v287 = vsel %vm75, %v271, 0
  %v290 = vsel %vm75, %v272, 0
  %v293 = vsel %vm75, %v273, 0
  %295 = vmatprep.subr.mxu0 0.0
  %296 = vmatpush1.msra.mxu0 %v275
  %297 = vmatprep.subr.mxu0 0.0
  %298 = vmatpush1.msra.mxu0 %v276
  %299 = vmatprep.subr.mxu0 0.0
  %300 = vmatpush1.msra.mxu0 %v277
  %301 = vmatprep.subr.mxu0 0.0
  %302 = vmatpush1.msra.mxu0 %v278
  %303 = vmatprep.subr.mxu0 0.0
  %304 = vmatpush1.msra.mxu0 %v279
  %305 = vmatprep.subr.mxu0 0.0
  %306 = vmatpush1.msra.mxu0 %v280
  %307 = vmatprep.subr.mxu0 0.0
  %308 = vmatpush1.msra.mxu0 %v281
  %309 = vmatprep.subr.mxu0 0.0
  %310 = vmatpush1.msra.mxu0 %v282
  %311 = vmatprep.subr.mxu0 0.0
  %312 = vmatpush1.msra.mxu0 0.0
  %313 = vmatprep.subr.mxu0 0.0
  %314 = vmatpush1.msra.mxu0 0.0
  %315 = vmatprep.subr.mxu0 0.0
  %316 = vmatpush1.msra.mxu0 0.0
  %317 = vmatprep.subr.mxu0 0.0
  %318 = vmatpush1.msra.mxu0 0.0
  %319 = vmatprep.subr.mxu0 0.0
  %320 = vmatpush1.msra.mxu0 0.0
  %321 = vmatprep.subr.mxu0 0.0
  %322 = vmatpush1.msra.mxu0 0.0
  %323 = vmatprep.subr.mxu0 0.0
  %324 = vmatpush1.msra.mxu0 0.0
  %325 = vmatprep.subr.mxu0 0.0
  %326 = vmatpush1.msra.mxu0 0.0
  %327 = vmatprep.subr.mxu0 0.0
  %328 = vmatpush1.msra.mxu0 0.0
  %329 = vmatprep.subr.mxu0 0.0
  %330 = vmatpush1.msra.mxu0 0.0
  %331 = vmatprep.subr.mxu0 0.0
  %332 = vmatpush1.msra.mxu0 0.0
  %333 = vmatprep.subr.mxu0 0.0
  %334 = vmatpush1.msra.mxu0 0.0
  %335 = vmatprep.subr.mxu0 0.0
  %336 = vmatpush1.msra.mxu0 0.0
  %337 = vmatprep.subr.mxu0 0.0
  %338 = vmatpush1.msra.mxu0 0.0
  %339 = vmatprep.subr.mxu0 0.0
  %340 = vmatpush1.msra.mxu0 0.0
  %341 = vmatprep.subr.mxu0 0.0
  %342 = vmatpush1.msra.mxu0 0.0
  %343 = vmatprep.subr.mxu0 0.0
  %344 = vmatpush1.msra.mxu0 0.0
  %345 = vmatprep.subr.mxu0 0.0
  %346 = vmatpush1.msra.mxu0 0.0
  %347 = vmatprep.subr.mxu0 0.0
  %348 = vmatpush1.msra.mxu0 0.0
  %349 = vmatprep.subr.mxu0 0.0
  %350 = vmatpush1.msra.mxu0 0.0
  %351 = vmatprep.subr.mxu0 0.0
  %352 = vmatpush1.msra.mxu0 0.0
  %353 = vmatprep.subr.mxu0 0.0
  %354 = vmatpush1.msra.mxu0 0.0
  %355 = vmatprep.subr.mxu0 0.0
  %356 = vmatpush1.msra.mxu0 0.0
  %357 = vmatprep.subr.mxu0 0.0
  %358 = vmatpush1.msra.mxu0 0.0
  %359 = vmatprep.mubr.f32.mxu0 0.0
  %360 = vmatmul.mubr.f32.gmra.mrb[0].mxu0 %v284
  %v361 = vpop.f32.mrb[0].mxu0
  %v362 = vadd.f32 0.0, %v361
  %v363 = vpop.f32.mrb[0].mxu0
  %364 = vmatprep.mubr.f32.mxu0 0.0
  %365 = vmatmul.mubr.f32.gmra.mrb[0].mxu0 %v287
  %v366 = vpop.f32.mrb[0].mxu0
  %v367 = vadd.f32 0.0, %v366
  %v368 = vpop.f32.mrb[0].mxu0
  %369 = vmatprep.mubr.f32.mxu0 0.0
  %370 = vmatmul.mubr.f32.gmra.mrb[0].mxu0 %v290
  %v371 = vpop.f32.mrb[0].mxu0
  %v372 = vadd.f32 0.0, %v371
  %v373 = vpop.f32.mrb[0].mxu0
  %374 = vmatprep.mubr.f32.mxu0 0.0
  %375 = vmatmul.mubr.f32.gmra.mrb[0].mxu0 %v293
  %v376 = vpop.f32.mrb[0].mxu0
  %v377 = vadd.f32 0.0, %v376
  %v378 = vpop.f32.mrb[0].mxu0
  %379 = vdwg.mxu0
  %v380 = vadd.f32 %v252, %v362
  %v381 = vadd.f32 %v257, %v367
  %v382 = vadd.f32 %v262, %v372
  %v383 = vadd.f32 %v267, %v377
  %v384 = vld [vmem:[%s7] sm:$0x1]
  %v385 = vld [vmem:[%s7 + $0x1] sm:$0x1]
  %v386 = vadd.f32 %v380, %v381
  %v387 = vadd.f32 %v386, %v382
  %v388 = vadd.f32 %v387, %v383
  %v389 = vrot.slane %v388, 4
  %v390 = vadd.f32 %v388, %v389
  %v391 = vrot.slane %v390, 2
  %v392 = vadd.f32 %v390, %v391
  %v393 = vrot.slane %v392, 1
  %v394 = vadd.f32 %v392, %v393
  %v395 = vmul.f32 %v380, %v380
  %v396 = vmul.f32 %v381, %v381
  %v397 = vmul.f32 %v382, %v382
  %v398 = vmul.f32 %v383, %v383
  %v399 = vadd.f32 %v395, %v396
  %v400 = vadd.f32 %v399, %v397
  %v401 = vadd.f32 %v400, %v398
  %v402 = vrot.slane %v401, 4
  %v403 = vadd.f32 %v401, %v402
  %v404 = vrot.slane %v403, 2
  %v405 = vadd.f32 %v403, %v404
  %v406 = vrot.slane %v405, 1
  %v407 = vadd.f32 %v405, %v406
  %408 = vmatprep.subr.mxu0 0.0
  %409 = vmatpush1.msra.mxu0 %v33
  %410 = vmatprep.subr.mxu0 0.0
  %411 = vmatpush1.msra.mxu0 %v34
  %412 = vmatprep.subr.mxu0 0.0
  %413 = vmatpush1.msra.mxu0 %v35
  %414 = vmatprep.subr.mxu0 0.0
  %415 = vmatpush1.msra.mxu0 %v36
  %416 = vmatprep.subr.mxu0 0.0
  %417 = vmatpush1.msra.mxu0 %v37
  %418 = vmatprep.subr.mxu0 0.0
  %419 = vmatpush1.msra.mxu0 %v38
  %420 = vmatprep.subr.mxu0 0.0
  %421 = vmatpush1.msra.mxu0 %v39
  %422 = vmatprep.subr.mxu0 0.0
  %423 = vmatpush1.msra.mxu0 %v40
  %424 = vmatprep.subr.mxu0 0.0
  %425 = vmatpush1.msra.mxu0 %v41
  %426 = vmatprep.subr.mxu0 0.0
  %427 = vmatpush1.msra.mxu0 %v42
  %428 = vmatprep.subr.mxu0 0.0
  %429 = vmatpush1.msra.mxu0 %v43
  %430 = vmatprep.subr.mxu0 0.0
  %431 = vmatpush1.msra.mxu0 %v44
  %432 = vmatprep.subr.mxu0 0.0
  %433 = vmatpush1.msra.mxu0 %v45
  %434 = vmatprep.subr.mxu0 0.0
  %435 = vmatpush1.msra.mxu0 %v46
  %436 = vmatprep.subr.mxu0 0.0
  %437 = vmatpush1.msra.mxu0 %v47
  %438 = vmatprep.subr.mxu0 0.0
  %439 = vmatpush1.msra.mxu0 %v48
  %440 = vmatprep.subr.mxu0 0.0
  %441 = vmatpush1.msra.mxu0 0.0
  %442 = vmatprep.subr.mxu0 0.0
  %443 = vmatpush1.msra.mxu0 0.0
  %444 = vmatprep.subr.mxu0 0.0
  %445 = vmatpush1.msra.mxu0 0.0
  %446 = vmatprep.subr.mxu0 0.0
  %447 = vmatpush1.msra.mxu0 0.0
  %448 = vmatprep.subr.mxu0 0.0
  %449 = vmatpush1.msra.mxu0 0.0
  %450 = vmatprep.subr.mxu0 0.0
  %451 = vmatpush1.msra.mxu0 0.0
  %452 = vmatprep.subr.mxu0 0.0
  %453 = vmatpush1.msra.mxu0 0.0
  %454 = vmatprep.subr.mxu0 0.0
  %455 = vmatpush1.msra.mxu0 0.0
  %456 = vmatprep.subr.mxu0 0.0
  %457 = vmatpush1.msra.mxu0 0.0
  %458 = vmatprep.subr.mxu0 0.0
  %459 = vmatpush1.msra.mxu0 0.0
  %460 = vmatprep.subr.mxu0 0.0
  %461 = vmatpush1.msra.mxu0 0.0
  %462 = vmatprep.subr.mxu0 0.0
  %463 = vmatpush1.msra.mxu0 0.0
  %464 = vmatprep.subr.mxu0 0.0
  %465 = vmatpush1.msra.mxu0 0.0
  %466 = vmatprep.subr.mxu0 0.0
  %467 = vmatpush1.msra.mxu0 0.0
  %468 = vmatprep.subr.mxu0 0.0
  %469 = vmatpush1.msra.mxu0 0.0
  %470 = vmatprep.subr.mxu0 0.0
  %471 = vmatpush1.msra.mxu0 0.0
  %472 = vmatprep.mubr.f32.mxu0 0.0
  %473 = vmatmul.mubr.f32.gmra.mrb[0].mxu0 %v394
  %v474 = vpop.f32.mrb[0].mxu0
  %v475 = vadd.f32 0.0, %v474
  %v476 = vpop.f32.mrb[0].mxu0
  %477 = vdwg.mxu0
  %v478 = vmul.f32 %v475, 0.001953125
  %479 = vmatprep.subr.mxu0 0.0
  %480 = vmatpush1.msra.mxu0 %v33
  %481 = vmatprep.subr.mxu0 0.0
  %482 = vmatpush1.msra.mxu0 %v34
  %483 = vmatprep.subr.mxu0 0.0
  %484 = vmatpush1.msra.mxu0 %v35
  %485 = vmatprep.subr.mxu0 0.0
  %486 = vmatpush1.msra.mxu0 %v36
  %487 = vmatprep.subr.mxu0 0.0
  %488 = vmatpush1.msra.mxu0 %v37
  %489 = vmatprep.subr.mxu0 0.0
  %490 = vmatpush1.msra.mxu0 %v38
  %491 = vmatprep.subr.mxu0 0.0
  %492 = vmatpush1.msra.mxu0 %v39
  %493 = vmatprep.subr.mxu0 0.0
  %494 = vmatpush1.msra.mxu0 %v40
  %495 = vmatprep.subr.mxu0 0.0
  %496 = vmatpush1.msra.mxu0 %v41
  %497 = vmatprep.subr.mxu0 0.0
  %498 = vmatpush1.msra.mxu0 %v42
  %499 = vmatprep.subr.mxu0 0.0
  %500 = vmatpush1.msra.mxu0 %v43
  %501 = vmatprep.subr.mxu0 0.0
  %502 = vmatpush1.msra.mxu0 %v44
  %503 = vmatprep.subr.mxu0 0.0
  %504 = vmatpush1.msra.mxu0 %v45
  %505 = vmatprep.subr.mxu0 0.0
  %506 = vmatpush1.msra.mxu0 %v46
  %507 = vmatprep.subr.mxu0 0.0
  %508 = vmatpush1.msra.mxu0 %v47
  %509 = vmatprep.subr.mxu0 0.0
  %510 = vmatpush1.msra.mxu0 %v48
  %511 = vmatprep.subr.mxu0 0.0
  %512 = vmatpush1.msra.mxu0 0.0
  %513 = vmatprep.subr.mxu0 0.0
  %514 = vmatpush1.msra.mxu0 0.0
  %515 = vmatprep.subr.mxu0 0.0
  %516 = vmatpush1.msra.mxu0 0.0
  %517 = vmatprep.subr.mxu0 0.0
  %518 = vmatpush1.msra.mxu0 0.0
  %519 = vmatprep.subr.mxu0 0.0
  %520 = vmatpush1.msra.mxu0 0.0
  %521 = vmatprep.subr.mxu0 0.0
  %522 = vmatpush1.msra.mxu0 0.0
  %523 = vmatprep.subr.mxu0 0.0
  %524 = vmatpush1.msra.mxu0 0.0
  %525 = vmatprep.subr.mxu0 0.0
  %526 = vmatpush1.msra.mxu0 0.0
  %527 = vmatprep.subr.mxu0 0.0
  %528 = vmatpush1.msra.mxu0 0.0
  %529 = vmatprep.subr.mxu0 0.0
  %530 = vmatpush1.msra.mxu0 0.0
  %531 = vmatprep.subr.mxu0 0.0
  %532 = vmatpush1.msra.mxu0 0.0
  %533 = vmatprep.subr.mxu0 0.0
  %534 = vmatpush1.msra.mxu0 0.0
  %535 = vmatprep.subr.mxu0 0.0
  %536 = vmatpush1.msra.mxu0 0.0
  %537 = vmatprep.subr.mxu0 0.0
  %538 = vmatpush1.msra.mxu0 0.0
  %539 = vmatprep.subr.mxu0 0.0
  %540 = vmatpush1.msra.mxu0 0.0
  %541 = vmatprep.subr.mxu0 0.0
  %542 = vmatpush1.msra.mxu0 0.0
  %543 = vmatprep.mubr.f32.mxu0 0.0
  %544 = vmatmul.mubr.f32.gmra.mrb[0].mxu0 %v407
  %v545 = vpop.f32.mrb[0].mxu0
  %v546 = vadd.f32 0.0, %v545
  %v547 = vpop.f32.mrb[0].mxu0
  %548 = vdwg.mxu0
  %v549 = vmul.f32 %v546, 0.001953125
  %v550 = vmul.f32 %v478, %v478
  %v551 = vsub.f32 %v549, %v550
  %v552 = vmax.f32 %v551, 0.0
  %v553 = vadd.f32 %v552, 1e-05
  %v554 = vrsqrt.pop %v553
  %v555 = vmul.f32 %v384, %v554
  %v556 = vmul.f32 %v478, %v555
  %v557 = vsub.f32 %v385, %v556
  %vm558 = vcmask 64512
  %v560 = vsel %vm558, %v555, 0
  %562 = vmatprep.subr.mxu0 0.0
  %563 = vmatpush1.msra.mxu0 %v49
  %564 = vmatprep.subr.mxu0 0.0
  %565 = vmatpush1.msra.mxu0 0.0
  %566 = vmatprep.subr.mxu0 0.0
  %567 = vmatpush1.msra.mxu0 0.0
  %568 = vmatprep.subr.mxu0 0.0
  %569 = vmatpush1.msra.mxu0 0.0
  %570 = vmatprep.subr.mxu0 0.0
  %571 = vmatpush1.msra.mxu0 0.0
  %572 = vmatprep.subr.mxu0 0.0
  %573 = vmatpush1.msra.mxu0 0.0
  %574 = vmatprep.subr.mxu0 0.0
  %575 = vmatpush1.msra.mxu0 0.0
  %576 = vmatprep.subr.mxu0 0.0
  %577 = vmatpush1.msra.mxu0 0.0
  %578 = vmatprep.subr.mxu0 0.0
  %579 = vmatpush1.msra.mxu0 0.0
  %580 = vmatprep.subr.mxu0 0.0
  %581 = vmatpush1.msra.mxu0 0.0
  %582 = vmatprep.subr.mxu0 0.0
  %583 = vmatpush1.msra.mxu0 0.0
  %584 = vmatprep.subr.mxu0 0.0
  %585 = vmatpush1.msra.mxu0 0.0
  %586 = vmatprep.subr.mxu0 0.0
  %587 = vmatpush1.msra.mxu0 0.0
  %588 = vmatprep.subr.mxu0 0.0
  %589 = vmatpush1.msra.mxu0 0.0
  %590 = vmatprep.subr.mxu0 0.0
  %591 = vmatpush1.msra.mxu0 0.0
  %592 = vmatprep.subr.mxu0 0.0
  %593 = vmatpush1.msra.mxu0 0.0
  %594 = vmatprep.subr.mxu0 0.0
  %595 = vmatpush1.msra.mxu0 0.0
  %596 = vmatprep.subr.mxu0 0.0
  %597 = vmatpush1.msra.mxu0 0.0
  %598 = vmatprep.subr.mxu0 0.0
  %599 = vmatpush1.msra.mxu0 0.0
  %600 = vmatprep.subr.mxu0 0.0
  %601 = vmatpush1.msra.mxu0 0.0
  %602 = vmatprep.subr.mxu0 0.0
  %603 = vmatpush1.msra.mxu0 0.0
  %604 = vmatprep.subr.mxu0 0.0
  %605 = vmatpush1.msra.mxu0 0.0
  %606 = vmatprep.subr.mxu0 0.0
  %607 = vmatpush1.msra.mxu0 0.0
  %608 = vmatprep.subr.mxu0 0.0
  %609 = vmatpush1.msra.mxu0 0.0
  %610 = vmatprep.subr.mxu0 0.0
  %611 = vmatpush1.msra.mxu0 0.0
  %612 = vmatprep.subr.mxu0 0.0
  %613 = vmatpush1.msra.mxu0 0.0
  %614 = vmatprep.subr.mxu0 0.0
  %615 = vmatpush1.msra.mxu0 0.0
  %616 = vmatprep.subr.mxu0 0.0
  %617 = vmatpush1.msra.mxu0 0.0
  %618 = vmatprep.subr.mxu0 0.0
  %619 = vmatpush1.msra.mxu0 0.0
  %620 = vmatprep.subr.mxu0 0.0
  %621 = vmatpush1.msra.mxu0 0.0
  %622 = vmatprep.subr.mxu0 0.0
  %623 = vmatpush1.msra.mxu0 0.0
  %624 = vmatprep.subr.mxu0 0.0
  %625 = vmatpush1.msra.mxu0 0.0
  %626 = vmatprep.mubr.f32.mxu0 0.0
  %627 = vmatmul.mubr.f32.gmra.mrb[0].mxu0 %v560
  %v628 = vpop.f32.mrb[0].mxu0
  %v629 = vadd.f32 0.0, %v628
  %v630 = vpop.f32.mrb[0].mxu0
  %631 = vdwg.mxu0
  %v633 = vsel %vm558, %v557, 0
  %635 = vmatprep.subr.mxu0 0.0
  %636 = vmatpush1.msra.mxu0 %v49
  %637 = vmatprep.subr.mxu0 0.0
  %638 = vmatpush1.msra.mxu0 0.0
  %639 = vmatprep.subr.mxu0 0.0
  %640 = vmatpush1.msra.mxu0 0.0
  %641 = vmatprep.subr.mxu0 0.0
  %642 = vmatpush1.msra.mxu0 0.0
  %643 = vmatprep.subr.mxu0 0.0
  %644 = vmatpush1.msra.mxu0 0.0
  %645 = vmatprep.subr.mxu0 0.0
  %646 = vmatpush1.msra.mxu0 0.0
  %647 = vmatprep.subr.mxu0 0.0
  %648 = vmatpush1.msra.mxu0 0.0
  %649 = vmatprep.subr.mxu0 0.0
  %650 = vmatpush1.msra.mxu0 0.0
  %651 = vmatprep.subr.mxu0 0.0
  %652 = vmatpush1.msra.mxu0 0.0
  %653 = vmatprep.subr.mxu0 0.0
  %654 = vmatpush1.msra.mxu0 0.0
  %655 = vmatprep.subr.mxu0 0.0
  %656 = vmatpush1.msra.mxu0 0.0
  %657 = vmatprep.subr.mxu0 0.0
  %658 = vmatpush1.msra.mxu0 0.0
  %659 = vmatprep.subr.mxu0 0.0
  %660 = vmatpush1.msra.mxu0 0.0
  %661 = vmatprep.subr.mxu0 0.0
  %662 = vmatpush1.msra.mxu0 0.0
  %663 = vmatprep.subr.mxu0 0.0
  %664 = vmatpush1.msra.mxu0 0.0
  %665 = vmatprep.subr.mxu0 0.0
  %666 = vmatpush1.msra.mxu0 0.0
  %667 = vmatprep.subr.mxu0 0.0
  %668 = vmatpush1.msra.mxu0 0.0
  %669 = vmatprep.subr.mxu0 0.0
  %670 = vmatpush1.msra.mxu0 0.0
  %671 = vmatprep.subr.mxu0 0.0
  %672 = vmatpush1.msra.mxu0 0.0
  %673 = vmatprep.subr.mxu0 0.0
  %674 = vmatpush1.msra.mxu0 0.0
  %675 = vmatprep.subr.mxu0 0.0
  %676 = vmatpush1.msra.mxu0 0.0
  %677 = vmatprep.subr.mxu0 0.0
  %678 = vmatpush1.msra.mxu0 0.0
  %679 = vmatprep.subr.mxu0 0.0
  %680 = vmatpush1.msra.mxu0 0.0
  %681 = vmatprep.subr.mxu0 0.0
  %682 = vmatpush1.msra.mxu0 0.0
  %683 = vmatprep.subr.mxu0 0.0
  %684 = vmatpush1.msra.mxu0 0.0
  %685 = vmatprep.subr.mxu0 0.0
  %686 = vmatpush1.msra.mxu0 0.0
  %687 = vmatprep.subr.mxu0 0.0
  %688 = vmatpush1.msra.mxu0 0.0
  %689 = vmatprep.subr.mxu0 0.0
  %690 = vmatpush1.msra.mxu0 0.0
  %691 = vmatprep.subr.mxu0 0.0
  %692 = vmatpush1.msra.mxu0 0.0
  %693 = vmatprep.subr.mxu0 0.0
  %694 = vmatpush1.msra.mxu0 0.0
  %695 = vmatprep.subr.mxu0 0.0
  %696 = vmatpush1.msra.mxu0 0.0
  %697 = vmatprep.subr.mxu0 0.0
  %698 = vmatpush1.msra.mxu0 0.0
  %699 = vmatprep.mubr.f32.mxu0 0.0
  %700 = vmatmul.mubr.f32.gmra.mrb[0].mxu0 %v633
  %v701 = vpop.f32.mrb[0].mxu0
  %v702 = vadd.f32 0.0, %v701
  %v703 = vpop.f32.mrb[0].mxu0
  %704 = vdwg.mxu0
  %v705 = vlaneseq
  %v706 = vshrl.u32 %v705, 7
  %v707 = vsub.s32 0, %v706
  %v708 = vrot.slane %v629, %v707
  %v709 = vmul.f32 %v380, %v708
  %v710 = vmul.f32 %v381, %v708
  %v711 = vmul.f32 %v382, %v708
  %v712 = vmul.f32 %v383, %v708
  %v713 = vlaneseq
  %v714 = vshrl.u32 %v713, 7
  %v715 = vsub.s32 0, %v714
  %v716 = vrot.slane %v702, %v715
  %v717 = vadd.f32 %v709, %v716
  %v718 = vadd.f32 %v710, %v716
  %v719 = vadd.f32 %v711, %v716
  %v720 = vadd.f32 %v712, %v716
  %721 = vst [vmem:[#allocation2] sm:$0x1] 0.0
  %722 = vst [vmem:[#allocation2 + $0x18] sm:$0x1] 0.0
  %723 = vst [vmem:[#allocation2 + $0x11] sm:$0x1] 0.0
  %724 = vst [vmem:[#allocation2 + $0x29] sm:$0x1] 0.0
  %725 = vst [vmem:[#allocation2 + $0x1] sm:$0xff] %v717
  %726 = vst [vmem:[#allocation2 + $0x9] sm:$0xff] %v718
  %727 = vst [vmem:[#allocation2 + $0x19] sm:$0xff] %v719
  %728 = vst [vmem:[#allocation2 + $0x21] sm:$0xff] %v720
  %v729 = vld [vmem:[#allocation2] sm:$0xff]
  %v730 = vld [vmem:[#allocation2 + $0x8] sm:$0xff]
  %v731 = vld [vmem:[#allocation2 + $0x18] sm:$0xff]
  %v732 = vld [vmem:[#allocation2 + $0x20] sm:$0xff]
  %v733 = vld [vmem:[%s2] sm:$0xff]
  %v734 = vld [vmem:[%s2 + $0x8] sm:$0xff]
  %v735 = vld [vmem:[%s2 + $0x10] sm:$0xff]
  %v736 = vld [vmem:[%s2 + $0x18] sm:$0xff]
  %v737 = vld [vmem:[%s2 + $0x20] sm:$0xff]
  %v738 = vld [vmem:[%s2 + $0x28] sm:$0xff]
  %v739 = vld [vmem:[%s2 + $0x30] sm:$0xff]
  %v740 = vld [vmem:[%s2 + $0x38] sm:$0xff]
  %v741 = vld [vmem:[%s2 + $0x40] sm:$0xff]
  %v742 = vld [vmem:[%s2 + $0x48] sm:$0xff]
  %v743 = vld [vmem:[%s2 + $0x50] sm:$0xff]
  %v744 = vld [vmem:[%s2 + $0x58] sm:$0xff]
  %v745 = vld [vmem:[%s2 + $0x60] sm:$0xff]
  %v746 = vld [vmem:[%s2 + $0x68] sm:$0xff]
  %v747 = vld [vmem:[%s2 + $0x70] sm:$0xff]
  %v748 = vld [vmem:[%s2 + $0x78] sm:$0xff]
  %v749 = vld [vmem:[#allocation2 + $0x1] sm:$0xff]
  %v750 = vld [vmem:[#allocation2 + $0x9] sm:$0xff]
  %v751 = vld [vmem:[#allocation2 + $0x19] sm:$0xff]
  %v752 = vld [vmem:[#allocation2 + $0x21] sm:$0xff]
  %s753 = scalar_lea.vmem %s2, 128
  %v754 = vld [vmem:[%s753] sm:$0xff]
  %v755 = vld [vmem:[%s753 + $0x8] sm:$0xff]
  %v756 = vld [vmem:[%s753 + $0x10] sm:$0xff]
  %v757 = vld [vmem:[%s753 + $0x18] sm:$0xff]
  %v758 = vld [vmem:[%s753 + $0x20] sm:$0xff]
  %v759 = vld [vmem:[%s753 + $0x28] sm:$0xff]
  %v760 = vld [vmem:[%s753 + $0x30] sm:$0xff]
  %v761 = vld [vmem:[%s753 + $0x38] sm:$0xff]
  %v762 = vld [vmem:[%s753 + $0x40] sm:$0xff]
  %v763 = vld [vmem:[%s753 + $0x48] sm:$0xff]
  %v764 = vld [vmem:[%s753 + $0x50] sm:$0xff]
  %v765 = vld [vmem:[%s753 + $0x58] sm:$0xff]
  %v766 = vld [vmem:[%s753 + $0x60] sm:$0xff]
  %v767 = vld [vmem:[%s753 + $0x68] sm:$0xff]
  %v768 = vld [vmem:[%s753 + $0x70] sm:$0xff]
  %v769 = vld [vmem:[%s753 + $0x78] sm:$0xff]
  %770 = vmatprep.subr.mxu0 0.0
  %771 = vmatpush1.msra.mxu0 %v754
  %772 = vmatprep.subr.mxu0 0.0
  %773 = vmatpush1.msra.mxu0 %v755
  %774 = vmatprep.subr.mxu0 0.0
  %775 = vmatpush1.msra.mxu0 %v756
  %776 = vmatprep.subr.mxu0 0.0
  %777 = vmatpush1.msra.mxu0 %v757
  %778 = vmatprep.subr.mxu0 0.0
  %779 = vmatpush1.msra.mxu0 %v758
  %780 = vmatprep.subr.mxu0 0.0
  %781 = vmatpush1.msra.mxu0 %v759
  %782 = vmatprep.subr.mxu0 0.0
  %783 = vmatpush1.msra.mxu0 %v760
  %784 = vmatprep.subr.mxu0 0.0
  %785 = vmatpush1.msra.mxu0 %v761
  %786 = vmatprep.subr.mxu0 0.0
  %787 = vmatpush1.msra.mxu0 %v762
  %788 = vmatprep.subr.mxu0 0.0
  %789 = vmatpush1.msra.mxu0 %v763
  %790 = vmatprep.subr.mxu0 0.0
  %791 = vmatpush1.msra.mxu0 %v764
  %792 = vmatprep.subr.mxu0 0.0
  %793 = vmatpush1.msra.mxu0 %v765
  %794 = vmatprep.subr.mxu0 0.0
  %795 = vmatpush1.msra.mxu0 %v766
  %796 = vmatprep.subr.mxu0 0.0
  %797 = vmatpush1.msra.mxu0 %v767
  %798 = vmatprep.subr.mxu0 0.0
  %799 = vmatpush1.msra.mxu0 %v768
  %800 = vmatprep.subr.mxu0 0.0
  %801 = vmatpush1.msra.mxu0 %v769
  %802 = vmatprep.subr.mxu0 0.0
  %803 = vmatpush1.msra.mxu0 0.0
  %804 = vmatprep.subr.mxu0 0.0
  %805 = vmatpush1.msra.mxu0 0.0
  %806 = vmatprep.subr.mxu0 0.0
  %807 = vmatpush1.msra.mxu0 0.0
  %808 = vmatprep.subr.mxu0 0.0
  %809 = vmatpush1.msra.mxu0 0.0
  %810 = vmatprep.subr.mxu0 0.0
  %811 = vmatpush1.msra.mxu0 0.0
  %812 = vmatprep.subr.mxu0 0.0
  %813 = vmatpush1.msra.mxu0 0.0
  %814 = vmatprep.subr.mxu0 0.0
  %815 = vmatpush1.msra.mxu0 0.0
  %816 = vmatprep.subr.mxu0 0.0
  %817 = vmatpush1.msra.mxu0 0.0
  %818 = vmatprep.subr.mxu0 0.0
  %819 = vmatpush1.msra.mxu0 0.0
  %820 = vmatprep.subr.mxu0 0.0
  %821 = vmatpush1.msra.mxu0 0.0
  %822 = vmatprep.subr.mxu0 0.0
  %823 = vmatpush1.msra.mxu0 0.0
  %824 = vmatprep.subr.mxu0 0.0
  %825 = vmatpush1.msra.mxu0 0.0
  %826 = vmatprep.subr.mxu0 0.0
  %827 = vmatpush1.msra.mxu0 0.0
  %828 = vmatprep.subr.mxu0 0.0
  %829 = vmatpush1.msra.mxu0 0.0
  %830 = vmatprep.subr.mxu0 0.0
  %831 = vmatpush1.msra.mxu0 0.0
  %832 = vmatprep.subr.mxu0 0.0
  %833 = vmatpush1.msra.mxu0 0.0
  %834 = vmatprep.mubr.f32.mxu0 0.0
  %835 = vmatmul.mubr.f32.gmra.mrb[0].mxu0 %v749
  %v836 = vpop.f32.mrb[0].mxu0
  %v837 = vadd.f32 0.0, %v836
  %v838 = vpop.f32.mrb[0].mxu0
  %839 = vmatprep.mubr.f32.mxu0 0.0
  %840 = vmatmul.mubr.f32.gmra.mrb[0].mxu0 %v750
  %v841 = vpop.f32.mrb[0].mxu0
  %v842 = vadd.f32 0.0, %v841
  %v843 = vpop.f32.mrb[0].mxu0
  %844 = vmatprep.mubr.f32.mxu0 0.0
  %845 = vmatmul.mubr.f32.gmra.mrb[0].mxu0 %v751
  %v846 = vpop.f32.mrb[0].mxu0
  %v847 = vadd.f32 0.0, %v846
  %v848 = vpop.f32.mrb[0].mxu0
  %849 = vmatprep.mubr.f32.mxu0 0.0
  %850 = vmatmul.mubr.f32.gmra.mrb[0].mxu0 %v752
  %v851 = vpop.f32.mrb[0].mxu0
  %v852 = vadd.f32 0.0, %v851
  %v853 = vpop.f32.mrb[0].mxu0
  %854 = vdwg.mxu0
  %855 = vmatprep.subr.mxu0 0.0
  %856 = vmatpush1.msra.mxu0 %v733
  %857 = vmatprep.subr.mxu0 0.0
  %858 = vmatpush1.msra.mxu0 %v734
  %859 = vmatprep.subr.mxu0 0.0
  %860 = vmatpush1.msra.mxu0 %v735
  %861 = vmatprep.subr.mxu0 0.0
  %862 = vmatpush1.msra.mxu0 %v736
  %863 = vmatprep.subr.mxu0 0.0
  %864 = vmatpush1.msra.mxu0 %v737
  %865 = vmatprep.subr.mxu0 0.0
  %866 = vmatpush1.msra.mxu0 %v738
  %867 = vmatprep.subr.mxu0 0.0
  %868 = vmatpush1.msra.mxu0 %v739
  %869 = vmatprep.subr.mxu0 0.0
  %870 = vmatpush1.msra.mxu0 %v740
  %871 = vmatprep.subr.mxu0 0.0
  %872 = vmatpush1.msra.mxu0 %v741
  %873 = vmatprep.subr.mxu0 0.0
  %874 = vmatpush1.msra.mxu0 %v742
  %875 = vmatprep.subr.mxu0 0.0
  %876 = vmatpush1.msra.mxu0 %v743
  %877 = vmatprep.subr.mxu0 0.0
  %878 = vmatpush1.msra.mxu0 %v744
  %879 = vmatprep.subr.mxu0 0.0
  %880 = vmatpush1.msra.mxu0 %v745
  %881 = vmatprep.subr.mxu0 0.0
  %882 = vmatpush1.msra.mxu0 %v746
  %883 = vmatprep.subr.mxu0 0.0
  %884 = vmatpush1.msra.mxu0 %v747
  %885 = vmatprep.subr.mxu0 0.0
  %886 = vmatpush1.msra.mxu0 %v748
  %887 = vmatprep.subr.mxu0 0.0
  %888 = vmatpush1.msra.mxu0 0.0
  %889 = vmatprep.subr.mxu0 0.0
  %890 = vmatpush1.msra.mxu0 0.0
  %891 = vmatprep.subr.mxu0 0.0
  %892 = vmatpush1.msra.mxu0 0.0
  %893 = vmatprep.subr.mxu0 0.0
  %894 = vmatpush1.msra.mxu0 0.0
  %895 = vmatprep.subr.mxu0 0.0
  %896 = vmatpush1.msra.mxu0 0.0
  %897 = vmatprep.subr.mxu0 0.0
  %898 = vmatpush1.msra.mxu0 0.0
  %899 = vmatprep.subr.mxu0 0.0
  %900 = vmatpush1.msra.mxu0 0.0
  %901 = vmatprep.subr.mxu0 0.0
  %902 = vmatpush1.msra.mxu0 0.0
  %903 = vmatprep.subr.mxu0 0.0
  %904 = vmatpush1.msra.mxu0 0.0
  %905 = vmatprep.subr.mxu0 0.0
  %906 = vmatpush1.msra.mxu0 0.0
  %907 = vmatprep.subr.mxu0 0.0
  %908 = vmatpush1.msra.mxu0 0.0
  %909 = vmatprep.subr.mxu0 0.0
  %910 = vmatpush1.msra.mxu0 0.0
  %911 = vmatprep.subr.mxu0 0.0
  %912 = vmatpush1.msra.mxu0 0.0
  %913 = vmatprep.subr.mxu0 0.0
  %914 = vmatpush1.msra.mxu0 0.0
  %915 = vmatprep.subr.mxu0 0.0
  %916 = vmatpush1.msra.mxu0 0.0
  %917 = vmatprep.subr.mxu0 0.0
  %918 = vmatpush1.msra.mxu0 0.0
  %919 = vmatprep.mubr.f32.mxu0 0.0
  %920 = vmatmul.mubr.f32.gmra.mrb[0].mxu0 %v729
  %v921 = vpop.f32.mrb[0].mxu0
  %v922 = vadd.f32 %v837, %v921
  %v923 = vpop.f32.mrb[0].mxu0
  %924 = vmatprep.mubr.f32.mxu0 0.0
  %925 = vmatmul.mubr.f32.gmra.mrb[0].mxu0 %v730
  %v926 = vpop.f32.mrb[0].mxu0
  %v927 = vadd.f32 %v842, %v926
  %v928 = vpop.f32.mrb[0].mxu0
  %929 = vmatprep.mubr.f32.mxu0 0.0
  %930 = vmatmul.mubr.f32.gmra.mrb[0].mxu0 %v731
  %v931 = vpop.f32.mrb[0].mxu0
  %v932 = vadd.f32 %v847, %v931
  %v933 = vpop.f32.mrb[0].mxu0
  %934 = vmatprep.mubr.f32.mxu0 0.0
  %935 = vmatmul.mubr.f32.gmra.mrb[0].mxu0 %v732
  %v936 = vpop.f32.mrb[0].mxu0
  %v937 = vadd.f32 %v852, %v936
  %v938 = vpop.f32.mrb[0].mxu0
  %939 = vdwg.mxu0
  %v940 = vld [vmem:[#allocation2 + $0x2] sm:$0xff]
  %v941 = vld [vmem:[#allocation2 + $0xa] sm:$0xff]
  %v942 = vld [vmem:[#allocation2 + $0x1a] sm:$0xff]
  %v943 = vld [vmem:[#allocation2 + $0x22] sm:$0xff]
  %s944 = scalar_lea.vmem %s2, 256
  %v945 = vld [vmem:[%s944] sm:$0xff]
  %v946 = vld [vmem:[%s944 + $0x8] sm:$0xff]
  %v947 = vld [vmem:[%s944 + $0x10] sm:$0xff]
  %v948 = vld [vmem:[%s944 + $0x18] sm:$0xff]
  %v949 = vld [vmem:[%s944 + $0x20] sm:$0xff]
  %v950 = vld [vmem:[%s944 + $0x28] sm:$0xff]
  %v951 = vld [vmem:[%s944 + $0x30] sm:$0xff]
  %v952 = vld [vmem:[%s944 + $0x38] sm:$0xff]
  %v953 = vld [vmem:[%s944 + $0x40] sm:$0xff]
  %v954 = vld [vmem:[%s944 + $0x48] sm:$0xff]
  %v955 = vld [vmem:[%s944 + $0x50] sm:$0xff]
  %v956 = vld [vmem:[%s944 + $0x58] sm:$0xff]
  %v957 = vld [vmem:[%s944 + $0x60] sm:$0xff]
  %v958 = vld [vmem:[%s944 + $0x68] sm:$0xff]
  %v959 = vld [vmem:[%s944 + $0x70] sm:$0xff]
  %v960 = vld [vmem:[%s944 + $0x78] sm:$0xff]
  %961 = vmatprep.subr.mxu0 0.0
  %962 = vmatpush1.msra.mxu0 %v945
  %963 = vmatprep.subr.mxu0 0.0
  %964 = vmatpush1.msra.mxu0 %v946
  %965 = vmatprep.subr.mxu0 0.0
  %966 = vmatpush1.msra.mxu0 %v947
  %967 = vmatprep.subr.mxu0 0.0
  %968 = vmatpush1.msra.mxu0 %v948
  %969 = vmatprep.subr.mxu0 0.0
  %970 = vmatpush1.msra.mxu0 %v949
  %971 = vmatprep.subr.mxu0 0.0
  %972 = vmatpush1.msra.mxu0 %v950
  %973 = vmatprep.subr.mxu0 0.0
  %974 = vmatpush1.msra.mxu0 %v951
  %975 = vmatprep.subr.mxu0 0.0
  %976 = vmatpush1.msra.mxu0 %v952
  %977 = vmatprep.subr.mxu0 0.0
  %978 = vmatpush1.msra.mxu0 %v953
  %979 = vmatprep.subr.mxu0 0.0
  %980 = vmatpush1.msra.mxu0 %v954
  %981 = vmatprep.subr.mxu0 0.0
  %982 = vmatpush1.msra.mxu0 %v955
  %983 = vmatprep.subr.mxu0 0.0
  %984 = vmatpush1.msra.mxu0 %v956
  %985 = vmatprep.subr.mxu0 0.0
  %986 = vmatpush1.msra.mxu0 %v957
  %987 = vmatprep.subr.mxu0 0.0
  %988 = vmatpush1.msra.mxu0 %v958
  %989 = vmatprep.subr.mxu0 0.0
  %990 = vmatpush1.msra.mxu0 %v959
  %991 = vmatprep.subr.mxu0 0.0
  %992 = vmatpush1.msra.mxu0 %v960
  %993 = vmatprep.subr.mxu0 0.0
  %994 = vmatpush1.msra.mxu0 0.0
  %995 = vmatprep.subr.mxu0 0.0
  %996 = vmatpush1.msra.mxu0 0.0
  %997 = vmatprep.subr.mxu0 0.0
  %998 = vmatpush1.msra.mxu0 0.0
  %999 = vmatprep.subr.mxu0 0.0
  %1000 = vmatpush1.msra.mxu0 0.0
  %1001 = vmatprep.subr.mxu0 0.0
  %1002 = vmatpush1.msra.mxu0 0.0
  %1003 = vmatprep.subr.mxu0 0.0
  %1004 = vmatpush1.msra.mxu0 0.0
  %1005 = vmatprep.subr.mxu0 0.0
  %1006 = vmatpush1.msra.mxu0 0.0
  %1007 = vmatprep.subr.mxu0 0.0
  %1008 = vmatpush1.msra.mxu0 0.0
  %1009 = vmatprep.subr.mxu0 0.0
  %1010 = vmatpush1.msra.mxu0 0.0
  %1011 = vmatprep.subr.mxu0 0.0
  %1012 = vmatpush1.msra.mxu0 0.0
  %1013 = vmatprep.subr.mxu0 0.0
  %1014 = vmatpush1.msra.mxu0 0.0
  %1015 = vmatprep.subr.mxu0 0.0
  %1016 = vmatpush1.msra.mxu0 0.0
  %1017 = vmatprep.subr.mxu0 0.0
  %1018 = vmatpush1.msra.mxu0 0.0
  %1019 = vmatprep.subr.mxu0 0.0
  %1020 = vmatpush1.msra.mxu0 0.0
  %1021 = vmatprep.subr.mxu0 0.0
  %1022 = vmatpush1.msra.mxu0 0.0
  %1023 = vmatprep.subr.mxu0 0.0
  %1024 = vmatpush1.msra.mxu0 0.0
  %1025 = vmatprep.mubr.f32.mxu0 0.0
  %1026 = vmatmul.mubr.f32.gmra.mrb[0].mxu0 %v940
  %v1027 = vpop.f32.mrb[0].mxu0
  %v1028 = vadd.f32 0.0, %v1027
  %v1029 = vpop.f32.mrb[0].mxu0
  %1030 = vmatprep.mubr.f32.mxu0 0.0
  %1031 = vmatmul.mubr.f32.gmra.mrb[0].mxu0 %v941
  %v1032 = vpop.f32.mrb[0].mxu0
  %v1033 = vadd.f32 0.0, %v1032
  %v1034 = vpop.f32.mrb[0].mxu0
  %1035 = vmatprep.mubr.f32.mxu0 0.0
  %1036 = vmatmul.mubr.f32.gmra.mrb[0].mxu0 %v942
  %v1037 = vpop.f32.mrb[0].mxu0
  %v1038 = vadd.f32 0.0, %v1037
  %v1039 = vpop.f32.mrb[0].mxu0
  %1040 = vmatprep.mubr.f32.mxu0 0.0
  %1041 = vmatmul.mubr.f32.gmra.mrb[0].mxu0 %v943
  %v1042 = vpop.f32.mrb[0].mxu0
  %v1043 = vadd.f32 0.0, %v1042
  %v1044 = vpop.f32.mrb[0].mxu0
  %1045 = vdwg.mxu0
  %v1046 = vadd.f32 %v922, %v1028
  %v1047 = vadd.f32 %v927, %v1033
  %v1048 = vadd.f32 %v932, %v1038
  %v1049 = vadd.f32 %v937, %v1043
  %v1050 = vld [vmem:[%s7 + $0x2] sm:$0x1]
  %v1051 = vld [vmem:[%s7 + $0x3] sm:$0x1]
  %v1052 = vadd.f32 %v1046, %v1047
  %v1053 = vadd.f32 %v1052, %v1048
  %v1054 = vadd.f32 %v1053, %v1049
  %v1055 = vrot.slane %v1054, 4
  %v1056 = vadd.f32 %v1054, %v1055
  %v1057 = vrot.slane %v1056, 2
  %v1058 = vadd.f32 %v1056, %v1057
  %v1059 = vrot.slane %v1058, 1
  %v1060 = vadd.f32 %v1058, %v1059
  %v1061 = vmul.f32 %v1046, %v1046
  %v1062 = vmul.f32 %v1047, %v1047
  %v1063 = vmul.f32 %v1048, %v1048
  %v1064 = vmul.f32 %v1049, %v1049
  %v1065 = vadd.f32 %v1061, %v1062
  %v1066 = vadd.f32 %v1065, %v1063
  %v1067 = vadd.f32 %v1066, %v1064
  %v1068 = vrot.slane %v1067, 4
  %v1069 = vadd.f32 %v1067, %v1068
  %v1070 = vrot.slane %v1069, 2
  %v1071 = vadd.f32 %v1069, %v1070
  %v1072 = vrot.slane %v1071, 1
  %v1073 = vadd.f32 %v1071, %v1072
  %1074 = vmatprep.subr.mxu0 0.0
  %1075 = vmatpush1.msra.mxu0 %v33
  %1076 = vmatprep.subr.mxu0 0.0
  %1077 = vmatpush1.msra.mxu0 %v34
  %1078 = vmatprep.subr.mxu0 0.0
  %1079 = vmatpush1.msra.mxu0 %v35
  %1080 = vmatprep.subr.mxu0 0.0
  %1081 = vmatpush1.msra.mxu0 %v36
  %1082 = vmatprep.subr.mxu0 0.0
  %1083 = vmatpush1.msra.mxu0 %v37
  %1084 = vmatprep.subr.mxu0 0.0
  %1085 = vmatpush1.msra.mxu0 %v38
  %1086 = vmatprep.subr.mxu0 0.0
  %1087 = vmatpush1.msra.mxu0 %v39
  %1088 = vmatprep.subr.mxu0 0.0
  %1089 = vmatpush1.msra.mxu0 %v40
  %1090 = vmatprep.subr.mxu0 0.0
  %1091 = vmatpush1.msra.mxu0 %v41
  %1092 = vmatprep.subr.mxu0 0.0
  %1093 = vmatpush1.msra.mxu0 %v42
  %1094 = vmatprep.subr.mxu0 0.0
  %1095 = vmatpush1.msra.mxu0 %v43
  %1096 = vmatprep.subr.mxu0 0.0
  %1097 = vmatpush1.msra.mxu0 %v44
  %1098 = vmatprep.subr.mxu0 0.0
  %1099 = vmatpush1.msra.mxu0 %v45
  %1100 = vmatprep.subr.mxu0 0.0
  %1101 = vmatpush1.msra.mxu0 %v46
  %1102 = vmatprep.subr.mxu0 0.0
  %1103 = vmatpush1.msra.mxu0 %v47
  %1104 = vmatprep.subr.mxu0 0.0
  %1105 = vmatpush1.msra.mxu0 %v48
  %1106 = vmatprep.subr.mxu0 0.0
  %1107 = vmatpush1.msra.mxu0 0.0
  %1108 = vmatprep.subr.mxu0 0.0
  %1109 = vmatpush1.msra.mxu0 0.0
  %1110 = vmatprep.subr.mxu0 0.0
  %1111 = vmatpush1.msra.mxu0 0.0
  %1112 = vmatprep.subr.mxu0 0.0
  %1113 = vmatpush1.msra.mxu0 0.0
  %1114 = vmatprep.subr.mxu0 0.0
  %1115 = vmatpush1.msra.mxu0 0.0
  %1116 = vmatprep.subr.mxu0 0.0
  %1117 = vmatpush1.msra.mxu0 0.0
  %1118 = vmatprep.subr.mxu0 0.0
  %1119 = vmatpush1.msra.mxu0 0.0
  %1120 = vmatprep.subr.mxu0 0.0
  %1121 = vmatpush1.msra.mxu0 0.0
  %1122 = vmatprep.subr.mxu0 0.0
  %1123 = vmatpush1.msra.mxu0 0.0
  %1124 = vmatprep.subr.mxu0 0.0
  %1125 = vmatpush1.msra.mxu0 0.0
  %1126 = vmatprep.subr.mxu0 0.0
  %1127 = vmatpush1.msra.mxu0 0.0
  %1128 = vmatprep.subr.mxu0 0.0
  %1129 = vmatpush1.msra.mxu0 0.0
  %1130 = vmatprep.subr.mxu0 0.0
  %1131 = vmatpush1.msra.mxu0 0.0
  %1132 = vmatprep.subr.mxu0 0.0
  %1133 = vmatpush1.msra.mxu0 0.0
  %1134 = vmatprep.subr.mxu0 0.0
  %1135 = vmatpush1.msra.mxu0 0.0
  %1136 = vmatprep.subr.mxu0 0.0
  %1137 = vmatpush1.msra.mxu0 0.0
  %1138 = vmatprep.mubr.f32.mxu0 0.0
  %1139 = vmatmul.mubr.f32.gmra.mrb[0].mxu0 %v1060
  %v1140 = vpop.f32.mrb[0].mxu0
  %v1141 = vadd.f32 0.0, %v1140
  %v1142 = vpop.f32.mrb[0].mxu0
  %1143 = vdwg.mxu0
  %v1144 = vmul.f32 %v1141, 0.001953125
  %1145 = vmatprep.subr.mxu0 0.0
  %1146 = vmatpush1.msra.mxu0 %v33
  %1147 = vmatprep.subr.mxu0 0.0
  %1148 = vmatpush1.msra.mxu0 %v34
  %1149 = vmatprep.subr.mxu0 0.0
  %1150 = vmatpush1.msra.mxu0 %v35
  %1151 = vmatprep.subr.mxu0 0.0
  %1152 = vmatpush1.msra.mxu0 %v36
  %1153 = vmatprep.subr.mxu0 0.0
  %1154 = vmatpush1.msra.mxu0 %v37
  %1155 = vmatprep.subr.mxu0 0.0
  %1156 = vmatpush1.msra.mxu0 %v38
  %1157 = vmatprep.subr.mxu0 0.0
  %1158 = vmatpush1.msra.mxu0 %v39
  %1159 = vmatprep.subr.mxu0 0.0
  %1160 = vmatpush1.msra.mxu0 %v40
  %1161 = vmatprep.subr.mxu0 0.0
  %1162 = vmatpush1.msra.mxu0 %v41
  %1163 = vmatprep.subr.mxu0 0.0
  %1164 = vmatpush1.msra.mxu0 %v42
  %1165 = vmatprep.subr.mxu0 0.0
  %1166 = vmatpush1.msra.mxu0 %v43
  %1167 = vmatprep.subr.mxu0 0.0
  %1168 = vmatpush1.msra.mxu0 %v44
  %1169 = vmatprep.subr.mxu0 0.0
  %1170 = vmatpush1.msra.mxu0 %v45
  %1171 = vmatprep.subr.mxu0 0.0
  %1172 = vmatpush1.msra.mxu0 %v46
  %1173 = vmatprep.subr.mxu0 0.0
  %1174 = vmatpush1.msra.mxu0 %v47
  %1175 = vmatprep.subr.mxu0 0.0
  %1176 = vmatpush1.msra.mxu0 %v48
  %1177 = vmatprep.subr.mxu0 0.0
  %1178 = vmatpush1.msra.mxu0 0.0
  %1179 = vmatprep.subr.mxu0 0.0
  %1180 = vmatpush1.msra.mxu0 0.0
  %1181 = vmatprep.subr.mxu0 0.0
  %1182 = vmatpush1.msra.mxu0 0.0
  %1183 = vmatprep.subr.mxu0 0.0
  %1184 = vmatpush1.msra.mxu0 0.0
  %1185 = vmatprep.subr.mxu0 0.0
  %1186 = vmatpush1.msra.mxu0 0.0
  %1187 = vmatprep.subr.mxu0 0.0
  %1188 = vmatpush1.msra.mxu0 0.0
  %1189 = vmatprep.subr.mxu0 0.0
  %1190 = vmatpush1.msra.mxu0 0.0
  %1191 = vmatprep.subr.mxu0 0.0
  %1192 = vmatpush1.msra.mxu0 0.0
  %1193 = vmatprep.subr.mxu0 0.0
  %1194 = vmatpush1.msra.mxu0 0.0
  %1195 = vmatprep.subr.mxu0 0.0
  %1196 = vmatpush1.msra.mxu0 0.0
  %1197 = vmatprep.subr.mxu0 0.0
  %1198 = vmatpush1.msra.mxu0 0.0
  %1199 = vmatprep.subr.mxu0 0.0
  %1200 = vmatpush1.msra.mxu0 0.0
  %1201 = vmatprep.subr.mxu0 0.0
  %1202 = vmatpush1.msra.mxu0 0.0
  %1203 = vmatprep.subr.mxu0 0.0
  %1204 = vmatpush1.msra.mxu0 0.0
  %1205 = vmatprep.subr.mxu0 0.0
  %1206 = vmatpush1.msra.mxu0 0.0
  %1207 = vmatprep.subr.mxu0 0.0
  %1208 = vmatpush1.msra.mxu0 0.0
  %1209 = vmatprep.mubr.f32.mxu0 0.0
  %1210 = vmatmul.mubr.f32.gmra.mrb[0].mxu0 %v1073
  %v1211 = vpop.f32.mrb[0].mxu0
  %v1212 = vadd.f32 0.0, %v1211
  %v1213 = vpop.f32.mrb[0].mxu0
  %1214 = vdwg.mxu0
  %v1215 = vmul.f32 %v1212, 0.001953125
  %v1216 = vmul.f32 %v1144, %v1144
  %v1217 = vsub.f32 %v1215, %v1216
  %v1218 = vmax.f32 %v1217, 0.0
  %v1219 = vadd.f32 %v1218, 1e-05
  %v1220 = vrsqrt.pop %v1219
  %v1221 = vmul.f32 %v1050, %v1220
  %v1222 = vmul.f32 %v1144, %v1221
  %v1223 = vsub.f32 %v1051, %v1222
  %v1225 = vsel %vm558, %v1221, 0
  %1227 = vmatprep.subr.mxu0 0.0
  %1228 = vmatpush1.msra.mxu0 %v49
  %1229 = vmatprep.subr.mxu0 0.0
  %1230 = vmatpush1.msra.mxu0 0.0
  %1231 = vmatprep.subr.mxu0 0.0
  %1232 = vmatpush1.msra.mxu0 0.0
  %1233 = vmatprep.subr.mxu0 0.0
  %1234 = vmatpush1.msra.mxu0 0.0
  %1235 = vmatprep.subr.mxu0 0.0
  %1236 = vmatpush1.msra.mxu0 0.0
  %1237 = vmatprep.subr.mxu0 0.0
  %1238 = vmatpush1.msra.mxu0 0.0
  %1239 = vmatprep.subr.mxu0 0.0
  %1240 = vmatpush1.msra.mxu0 0.0
  %1241 = vmatprep.subr.mxu0 0.0
  %1242 = vmatpush1.msra.mxu0 0.0
  %1243 = vmatprep.subr.mxu0 0.0
  %1244 = vmatpush1.msra.mxu0 0.0
  %1245 = vmatprep.subr.mxu0 0.0
  %1246 = vmatpush1.msra.mxu0 0.0
  %1247 = vmatprep.subr.mxu0 0.0
  %1248 = vmatpush1.msra.mxu0 0.0
  %1249 = vmatprep.subr.mxu0 0.0
  %1250 = vmatpush1.msra.mxu0 0.0
  %1251 = vmatprep.subr.mxu0 0.0
  %1252 = vmatpush1.msra.mxu0 0.0
  %1253 = vmatprep.subr.mxu0 0.0
  %1254 = vmatpush1.msra.mxu0 0.0
  %1255 = vmatprep.subr.mxu0 0.0
  %1256 = vmatpush1.msra.mxu0 0.0
  %1257 = vmatprep.subr.mxu0 0.0
  %1258 = vmatpush1.msra.mxu0 0.0
  %1259 = vmatprep.subr.mxu0 0.0
  %1260 = vmatpush1.msra.mxu0 0.0
  %1261 = vmatprep.subr.mxu0 0.0
  %1262 = vmatpush1.msra.mxu0 0.0
  %1263 = vmatprep.subr.mxu0 0.0
  %1264 = vmatpush1.msra.mxu0 0.0
  %1265 = vmatprep.subr.mxu0 0.0
  %1266 = vmatpush1.msra.mxu0 0.0
  %1267 = vmatprep.subr.mxu0 0.0
  %1268 = vmatpush1.msra.mxu0 0.0
  %1269 = vmatprep.subr.mxu0 0.0
  %1270 = vmatpush1.msra.mxu0 0.0
  %1271 = vmatprep.subr.mxu0 0.0
  %1272 = vmatpush1.msra.mxu0 0.0
  %1273 = vmatprep.subr.mxu0 0.0
  %1274 = vmatpush1.msra.mxu0 0.0
  %1275 = vmatprep.subr.mxu0 0.0
  %1276 = vmatpush1.msra.mxu0 0.0
  %1277 = vmatprep.subr.mxu0 0.0
  %1278 = vmatpush1.msra.mxu0 0.0
  %1279 = vmatprep.subr.mxu0 0.0
  %1280 = vmatpush1.msra.mxu0 0.0
  %1281 = vmatprep.subr.mxu0 0.0
  %1282 = vmatpush1.msra.mxu0 0.0
  %1283 = vmatprep.subr.mxu0 0.0
  %1284 = vmatpush1.msra.mxu0 0.0
  %1285 = vmatprep.subr.mxu0 0.0
  %1286 = vmatpush1.msra.mxu0 0.0
  %1287 = vmatprep.subr.mxu0 0.0
  %1288 = vmatpush1.msra.mxu0 0.0
  %1289 = vmatprep.subr.mxu0 0.0
  %1290 = vmatpush1.msra.mxu0 0.0
  %1291 = vmatprep.mubr.f32.mxu0 0.0
  %1292 = vmatmul.mubr.f32.gmra.mrb[0].mxu0 %v1225
  %v1293 = vpop.f32.mrb[0].mxu0
  %v1294 = vadd.f32 0.0, %v1293
  %v1295 = vpop.f32.mrb[0].mxu0
  %1296 = vdwg.mxu0
  %v1298 = vsel %vm558, %v1223, 0
  %1300 = vmatprep.subr.mxu0 0.0
  %1301 = vmatpush1.msra.mxu0 %v49
  %1302 = vmatprep.subr.mxu0 0.0
  %1303 = vmatpush1.msra.mxu0 0.0
  %1304 = vmatprep.subr.mxu0 0.0
  %1305 = vmatpush1.msra.mxu0 0.0
  %1306 = vmatprep.subr.mxu0 0.0
  %1307 = vmatpush1.msra.mxu0 0.0
  %1308 = vmatprep.subr.mxu0 0.0
  %1309 = vmatpush1.msra.mxu0 0.0
  %1310 = vmatprep.subr.mxu0 0.0
  %1311 = vmatpush1.msra.mxu0 0.0
  %1312 = vmatprep.subr.mxu0 0.0
  %1313 = vmatpush1.msra.mxu0 0.0
  %1314 = vmatprep.subr.mxu0 0.0
  %1315 = vmatpush1.msra.mxu0 0.0
  %1316 = vmatprep.subr.mxu0 0.0
  %1317 = vmatpush1.msra.mxu0 0.0
  %1318 = vmatprep.subr.mxu0 0.0
  %1319 = vmatpush1.msra.mxu0 0.0
  %1320 = vmatprep.subr.mxu0 0.0
  %1321 = vmatpush1.msra.mxu0 0.0
  %1322 = vmatprep.subr.mxu0 0.0
  %1323 = vmatpush1.msra.mxu0 0.0
  %1324 = vmatprep.subr.mxu0 0.0
  %1325 = vmatpush1.msra.mxu0 0.0
  %1326 = vmatprep.subr.mxu0 0.0
  %1327 = vmatpush1.msra.mxu0 0.0
  %1328 = vmatprep.subr.mxu0 0.0
  %1329 = vmatpush1.msra.mxu0 0.0
  %1330 = vmatprep.subr.mxu0 0.0
  %1331 = vmatpush1.msra.mxu0 0.0
  %1332 = vmatprep.subr.mxu0 0.0
  %1333 = vmatpush1.msra.mxu0 0.0
  %1334 = vmatprep.subr.mxu0 0.0
  %1335 = vmatpush1.msra.mxu0 0.0
  %1336 = vmatprep.subr.mxu0 0.0
  %1337 = vmatpush1.msra.mxu0 0.0
  %1338 = vmatprep.subr.mxu0 0.0
  %1339 = vmatpush1.msra.mxu0 0.0
  %1340 = vmatprep.subr.mxu0 0.0
  %1341 = vmatpush1.msra.mxu0 0.0
  %1342 = vmatprep.subr.mxu0 0.0
  %1343 = vmatpush1.msra.mxu0 0.0
  %1344 = vmatprep.subr.mxu0 0.0
  %1345 = vmatpush1.msra.mxu0 0.0
  %1346 = vmatprep.subr.mxu0 0.0
  %1347 = vmatpush1.msra.mxu0 0.0
  %1348 = vmatprep.subr.mxu0 0.0
  %1349 = vmatpush1.msra.mxu0 0.0
  %1350 = vmatprep.subr.mxu0 0.0
  %1351 = vmatpush1.msra.mxu0 0.0
  %1352 = vmatprep.subr.mxu0 0.0
  %1353 = vmatpush1.msra.mxu0 0.0
  %1354 = vmatprep.subr.mxu0 0.0
  %1355 = vmatpush1.msra.mxu0 0.0
  %1356 = vmatprep.subr.mxu0 0.0
  %1357 = vmatpush1.msra.mxu0 0.0
  %1358 = vmatprep.subr.mxu0 0.0
  %1359 = vmatpush1.msra.mxu0 0.0
  %1360 = vmatprep.subr.mxu0 0.0
  %1361 = vmatpush1.msra.mxu0 0.0
  %1362 = vmatprep.subr.mxu0 0.0
  %1363 = vmatpush1.msra.mxu0 0.0
  %1364 = vmatprep.mubr.f32.mxu0 0.0
  %1365 = vmatmul.mubr.f32.gmra.mrb[0].mxu0 %v1298
  %v1366 = vpop.f32.mrb[0].mxu0
  %v1367 = vadd.f32 0.0, %v1366
  %v1368 = vpop.f32.mrb[0].mxu0
  %1369 = vdwg.mxu0
  %v1370 = vlaneseq
  %v1371 = vshrl.u32 %v1370, 7
  %v1372 = vsub.s32 0, %v1371
  %v1373 = vrot.slane %v1294, %v1372
  %v1374 = vmul.f32 %v1046, %v1373
  %v1375 = vmul.f32 %v1047, %v1373
  %v1376 = vmul.f32 %v1048, %v1373
  %v1377 = vmul.f32 %v1049, %v1373
  %v1378 = vlaneseq
  %v1379 = vshrl.u32 %v1378, 7
  %v1380 = vsub.s32 0, %v1379
  %v1381 = vrot.slane %v1367, %v1380
  %v1382 = vadd.f32 %v1374, %v1381
  %v1383 = vadd.f32 %v1375, %v1381
  %v1384 = vadd.f32 %v1376, %v1381
  %v1385 = vadd.f32 %v1377, %v1381
  %s1386 = sld [smem:[#allocation3]]
  %v1387 = vmax.f32 %v1382, 0.0
  %v1388 = vmax.f32 %v1383, 0.0
  %v1389 = vmax.f32 %v1384, 0.0
  %v1390 = vmax.f32 %v1385, 0.0
  %v1391 = vmin.f32 %v1382, 0.0
  %v1392 = vmin.f32 %v1383, 0.0
  %v1393 = vmin.f32 %v1384, 0.0
  %v1394 = vmin.f32 %v1385, 0.0
  %v1395 = vstv %s1386
  %v1396 = vmul.f32 %v1395, %v1391
  %v1397 = vmul.f32 %v1395, %v1392
  %v1398 = vmul.f32 %v1395, %v1393
  %v1399 = vmul.f32 %v1395, %v1394
  %v1400 = vadd.f32 %v1387, %v1396
  %v1401 = vadd.f32 %v1388, %v1397
  %v1402 = vadd.f32 %v1389, %v1398
  %v1403 = vadd.f32 %v1390, %v1399
  %v1404 = vld [vmem:[%s5] sm:$0xff]
  %v1405 = vld [vmem:[%s5 + $0x8] sm:$0xff]
  %v1406 = vld [vmem:[%s5 + $0x10] sm:$0xff]
  %v1407 = vld [vmem:[%s5 + $0x18] sm:$0xff]
  %v1408 = vld [vmem:[%s5 + $0x20] sm:$0xff]
  %v1409 = vld [vmem:[%s5 + $0x28] sm:$0xff]
  %v1410 = vld [vmem:[%s5 + $0x30] sm:$0xff]
  %v1411 = vld [vmem:[%s5 + $0x38] sm:$0xff]
  %v1412 = vld [vmem:[%s5 + $0x40] sm:$0xff]
  %v1413 = vld [vmem:[%s5 + $0x48] sm:$0xff]
  %v1414 = vld [vmem:[%s5 + $0x50] sm:$0xff]
  %v1415 = vld [vmem:[%s5 + $0x58] sm:$0xff]
  %v1416 = vld [vmem:[%s5 + $0x60] sm:$0xff]
  %v1417 = vld [vmem:[%s5 + $0x68] sm:$0xff]
  %v1418 = vld [vmem:[%s5 + $0x70] sm:$0xff]
  %v1419 = vld [vmem:[%s5 + $0x78] sm:$0xff]
  %v1420 = vld [vmem:[%s5 + $0x80] sm:$0xff]
  %v1421 = vld [vmem:[%s5 + $0x88] sm:$0xff]
  %v1422 = vld [vmem:[%s5 + $0x90] sm:$0xff]
  %v1423 = vld [vmem:[%s5 + $0x98] sm:$0xff]
  %v1424 = vld [vmem:[%s5 + $0xa0] sm:$0xff]
  %v1425 = vld [vmem:[%s5 + $0xa8] sm:$0xff]
  %v1426 = vld [vmem:[%s5 + $0xb0] sm:$0xff]
  %v1427 = vld [vmem:[%s5 + $0xb8] sm:$0xff]
  %v1428 = vld [vmem:[%s5 + $0xc0] sm:$0xff]
  %v1429 = vld [vmem:[%s5 + $0xc8] sm:$0xff]
  %v1430 = vld [vmem:[%s5 + $0xd0] sm:$0xff]
  %v1431 = vld [vmem:[%s5 + $0xd8] sm:$0xff]
  %v1432 = vld [vmem:[%s5 + $0xe0] sm:$0xff]
  %v1433 = vld [vmem:[%s5 + $0xe8] sm:$0xff]
  %v1434 = vld [vmem:[%s5 + $0xf0] sm:$0xff]
  %v1435 = vld [vmem:[%s5 + $0xf8] sm:$0xff]
  %v1436 = vld [vmem:[%s6] sm:$0xff]
  %v1437 = vld [vmem:[%s6 + $0x8] sm:$0xff]
  %v1438 = vld [vmem:[%s6 + $0x10] sm:$0xff]
  %v1439 = vld [vmem:[%s6 + $0x18] sm:$0xff]
  %1440 = vmatprep.subr.mxu0 %v1405
  %1441 = vmatpush1.msra.mxu0 %v1404
  %1442 = vmatprep.subr.mxu0 %v1407
  %1443 = vmatpush1.msra.mxu0 %v1406
  %1444 = vmatprep.subr.mxu0 %v1409
  %1445 = vmatpush1.msra.mxu0 %v1408
  %1446 = vmatprep.subr.mxu0 %v1411
  %1447 = vmatpush1.msra.mxu0 %v1410
  %1448 = vmatprep.subr.mxu0 %v1413
  %1449 = vmatpush1.msra.mxu0 %v1412
  %1450 = vmatprep.subr.mxu0 %v1415
  %1451 = vmatpush1.msra.mxu0 %v1414
  %1452 = vmatprep.subr.mxu0 %v1417
  %1453 = vmatpush1.msra.mxu0 %v1416
  %1454 = vmatprep.subr.mxu0 %v1419
  %1455 = vmatpush1.msra.mxu0 %v1418
  %1456 = vmatprep.subr.mxu0 %v1421
  %1457 = vmatpush1.msra.mxu0 %v1420
  %1458 = vmatprep.subr.mxu0 %v1423
  %1459 = vmatpush1.msra.mxu0 %v1422
  %1460 = vmatprep.subr.mxu0 %v1425
  %1461 = vmatpush1.msra.mxu0 %v1424
  %1462 = vmatprep.subr.mxu0 %v1427
  %1463 = vmatpush1.msra.mxu0 %v1426
  %1464 = vmatprep.subr.mxu0 %v1429
  %1465 = vmatpush1.msra.mxu0 %v1428
  %1466 = vmatprep.subr.mxu0 %v1431
  %1467 = vmatpush1.msra.mxu0 %v1430
  %1468 = vmatprep.subr.mxu0 %v1433
  %1469 = vmatpush1.msra.mxu0 %v1432
  %1470 = vmatprep.subr.mxu0 %v1435
  %1471 = vmatpush1.msra.mxu0 %v1434
  %1472 = vmatprep.subr.mxu0 0.0
  %1473 = vmatpush1.msra.mxu0 0.0
  %1474 = vmatprep.subr.mxu0 0.0
  %1475 = vmatpush1.msra.mxu0 0.0
  %1476 = vmatprep.subr.mxu0 0.0
  %1477 = vmatpush1.msra.mxu0 0.0
  %1478 = vmatprep.subr.mxu0 0.0
  %1479 = vmatpush1.msra.mxu0 0.0
  %1480 = vmatprep.subr.mxu0 0.0
  %1481 = vmatpush1.msra.mxu0 0.0
  %1482 = vmatprep.subr.mxu0 0.0
  %1483 = vmatpush1.msra.mxu0 0.0
  %1484 = vmatprep.subr.mxu0 0.0
  %1485 = vmatpush1.msra.mxu0 0.0
  %1486 = vmatprep.subr.mxu0 0.0
  %1487 = vmatpush1.msra.mxu0 0.0
  %1488 = vmatprep.subr.mxu0 0.0
  %1489 = vmatpush1.msra.mxu0 0.0
  %1490 = vmatprep.subr.mxu0 0.0
  %1491 = vmatpush1.msra.mxu0 0.0
  %1492 = vmatprep.subr.mxu0 0.0
  %1493 = vmatpush1.msra.mxu0 0.0
  %1494 = vmatprep.subr.mxu0 0.0
  %1495 = vmatpush1.msra.mxu0 0.0
  %1496 = vmatprep.subr.mxu0 0.0
  %1497 = vmatpush1.msra.mxu0 0.0
  %1498 = vmatprep.subr.mxu0 0.0
  %1499 = vmatpush1.msra.mxu0 0.0
  %1500 = vmatprep.subr.mxu0 0.0
  %1501 = vmatpush1.msra.mxu0 0.0
  %1502 = vmatprep.subr.mxu0 0.0
  %1503 = vmatpush1.msra.mxu0 0.0
  %1504 = vmatprep.mubr.f32.mxu0 0.0
  %1505 = vmatmul.mubr.f32.gmra.mrb[0].mxu0 %v1400
  %v1506 = vpop.f32.mrb[0].mxu0
  %v1507 = vadd.f32 0.0, %v1506
  %v1508 = vpop.f32.mrb[0].mxu0
  %v1509 = vadd.f32 0.0, %v1508
  %1510 = vmatprep.mubr.f32.mxu0 0.0
  %1511 = vmatmul.mubr.f32.gmra.mrb[0].mxu0 %v1401
  %v1512 = vpop.f32.mrb[0].mxu0
  %v1513 = vadd.f32 0.0, %v1512
  %v1514 = vpop.f32.mrb[0].mxu0
  %v1515 = vadd.f32 0.0, %v1514
  %1516 = vdwg.mxu0
  %vm1517 = vcmask 130048
  %v1519 = vsel %vm1517, %v1436, 0
  %v1522 = vsel %vm1517, %v1437, 0
  %v1525 = vsel %vm1517, %v1438, 0
  %v1528 = vsel %vm1517, %v1439, 0
  %1530 = vmatprep.subr.mxu0 %v1509
  %1531 = vmatpush1.msra.mxu0 %v1507
  %1532 = vmatprep.subr.mxu0 %v1515
  %1533 = vmatpush1.msra.mxu0 %v1513
  %1534 = vmatprep.subr.mxu0 0.0
  %1535 = vmatpush1.msra.mxu0 0.0
  %1536 = vmatprep.subr.mxu0 0.0
  %1537 = vmatpush1.msra.mxu0 0.0
  %1538 = vmatprep.subr.mxu0 0.0
  %1539 = vmatpush1.msra.mxu0 0.0
  %1540 = vmatprep.subr.mxu0 0.0
  %1541 = vmatpush1.msra.mxu0 0.0
  %1542 = vmatprep.subr.mxu0 0.0
  %1543 = vmatpush1.msra.mxu0 0.0
  %1544 = vmatprep.subr.mxu0 0.0
  %1545 = vmatpush1.msra.mxu0 0.0
  %1546 = vmatprep.subr.mxu0 0.0
  %1547 = vmatpush1.msra.mxu0 0.0
  %1548 = vmatprep.subr.mxu0 0.0
  %1549 = vmatpush1.msra.mxu0 0.0
  %1550 = vmatprep.subr.mxu0 0.0
  %1551 = vmatpush1.msra.mxu0 0.0
  %1552 = vmatprep.subr.mxu0 0.0
  %1553 = vmatpush1.msra.mxu0 0.0
  %1554 = vmatprep.subr.mxu0 0.0
  %1555 = vmatpush1.msra.mxu0 0.0
  %1556 = vmatprep.subr.mxu0 0.0
  %1557 = vmatpush1.msra.mxu0 0.0
  %1558 = vmatprep.subr.mxu0 0.0
  %1559 = vmatpush1.msra.mxu0 0.0
  %1560 = vmatprep.subr.mxu0 0.0
  %1561 = vmatpush1.msra.mxu0 0.0
  %1562 = vmatprep.subr.mxu0 0.0
  %1563 = vmatpush1.msra.mxu0 0.0
  %1564 = vmatprep.subr.mxu0 0.0
  %1565 = vmatpush1.msra.mxu0 0.0
  %1566 = vmatprep.subr.mxu0 0.0
  %1567 = vmatpush1.msra.mxu0 0.0
  %1568 = vmatprep.subr.mxu0 0.0
  %1569 = vmatpush1.msra.mxu0 0.0
  %1570 = vmatprep.subr.mxu0 0.0
  %1571 = vmatpush1.msra.mxu0 0.0
  %1572 = vmatprep.subr.mxu0 0.0
  %1573 = vmatpush1.msra.mxu0 0.0
  %1574 = vmatprep.subr.mxu0 0.0
  %1575 = vmatpush1.msra.mxu0 0.0
  %1576 = vmatprep.subr.mxu0 0.0
  %1577 = vmatpush1.msra.mxu0 0.0
  %1578 = vmatprep.subr.mxu0 0.0
  %1579 = vmatpush1.msra.mxu0 0.0
  %1580 = vmatprep.subr.mxu0 0.0
  %1581 = vmatpush1.msra.mxu0 0.0
  %1582 = vmatprep.subr.mxu0 0.0
  %1583 = vmatpush1.msra.mxu0 0.0
  %1584 = vmatprep.subr.mxu0 0.0
  %1585 = vmatpush1.msra.mxu0 0.0
  %1586 = vmatprep.subr.mxu0 0.0
  %1587 = vmatpush1.msra.mxu0 0.0
  %1588 = vmatprep.subr.mxu0 0.0
  %1589 = vmatpush1.msra.mxu0 0.0
  %1590 = vmatprep.subr.mxu0 0.0
  %1591 = vmatpush1.msra.mxu0 0.0
  %1592 = vmatprep.subr.mxu0 0.0
  %1593 = vmatpush1.msra.mxu0 0.0
  %1594 = vmatprep.mubr.f32.mxu0 0.0
  %1595 = vmatmul.mubr.f32.gmra.mrb[0].mxu0 %v1519
  %v1596 = vpop.f32.mrb[0].mxu0
  %v1597 = vadd.f32 0.0, %v1596
  %v1598 = vpop.f32.mrb[0].mxu0
  %v1599 = vadd.f32 0.0, %v1598
  %1600 = vmatprep.mubr.f32.mxu0 0.0
  %1601 = vmatmul.mubr.f32.gmra.mrb[0].mxu0 %v1522
  %v1602 = vpop.f32.mrb[0].mxu0
  %v1603 = vadd.f32 0.0, %v1602
  %v1604 = vpop.f32.mrb[0].mxu0
  %v1605 = vadd.f32 0.0, %v1604
  %1606 = vmatprep.mubr.f32.mxu0 0.0
  %1607 = vmatmul.mubr.f32.gmra.mrb[0].mxu0 %v1525
  %v1608 = vpop.f32.mrb[0].mxu0
  %v1609 = vadd.f32 0.0, %v1608
  %v1610 = vpop.f32.mrb[0].mxu0
  %v1611 = vadd.f32 0.0, %v1610
  %1612 = vmatprep.mubr.f32.mxu0 0.0
  %1613 = vmatmul.mubr.f32.gmra.mrb[0].mxu0 %v1528
  %v1614 = vpop.f32.mrb[0].mxu0
  %v1615 = vadd.f32 0.0, %v1614
  %v1616 = vpop.f32.mrb[0].mxu0
  %v1617 = vadd.f32 0.0, %v1616
  %1618 = vdwg.mxu0
  %1619 = vst [vmem:[%s9] sm:$0xff] %v1597
  %1620 = vst [vmem:[%s9 + $0x8] sm:$0xff] %v1599
  %1621 = vst [vmem:[%s9 + $0x10] sm:$0xff] %v1603
  %1622 = vst [vmem:[%s9 + $0x18] sm:$0xff] %v1605
  %1623 = vst [vmem:[%s9 + $0x20] sm:$0xff] %v1609
  %1624 = vst [vmem:[%s9 + $0x28] sm:$0xff] %v1611
  %1625 = vst [vmem:[%s9 + $0x30] sm:$0xff] %v1615
  %1626 = vst [vmem:[%s9 + $0x38] sm:$0xff] %v1617
  %1627 = vmatprep.subr.mxu0 %v1405
  %1628 = vmatpush1.msra.mxu0 %v1404
  %1629 = vmatprep.subr.mxu0 %v1407
  %1630 = vmatpush1.msra.mxu0 %v1406
  %1631 = vmatprep.subr.mxu0 %v1409
  %1632 = vmatpush1.msra.mxu0 %v1408
  %1633 = vmatprep.subr.mxu0 %v1411
  %1634 = vmatpush1.msra.mxu0 %v1410
  %1635 = vmatprep.subr.mxu0 %v1413
  %1636 = vmatpush1.msra.mxu0 %v1412
  %1637 = vmatprep.subr.mxu0 %v1415
  %1638 = vmatpush1.msra.mxu0 %v1414
  %1639 = vmatprep.subr.mxu0 %v1417
  %1640 = vmatpush1.msra.mxu0 %v1416
  %1641 = vmatprep.subr.mxu0 %v1419
  %1642 = vmatpush1.msra.mxu0 %v1418
  %1643 = vmatprep.subr.mxu0 %v1421
  %1644 = vmatpush1.msra.mxu0 %v1420
  %1645 = vmatprep.subr.mxu0 %v1423
  %1646 = vmatpush1.msra.mxu0 %v1422
  %1647 = vmatprep.subr.mxu0 %v1425
  %1648 = vmatpush1.msra.mxu0 %v1424
  %1649 = vmatprep.subr.mxu0 %v1427
  %1650 = vmatpush1.msra.mxu0 %v1426
  %1651 = vmatprep.subr.mxu0 %v1429
  %1652 = vmatpush1.msra.mxu0 %v1428
  %1653 = vmatprep.subr.mxu0 %v1431
  %1654 = vmatpush1.msra.mxu0 %v1430
  %1655 = vmatprep.subr.mxu0 %v1433
  %1656 = vmatpush1.msra.mxu0 %v1432
  %1657 = vmatprep.subr.mxu0 %v1435
  %1658 = vmatpush1.msra.mxu0 %v1434
  %1659 = vmatprep.subr.mxu0 0.0
  %1660 = vmatpush1.msra.mxu0 0.0
  %1661 = vmatprep.subr.mxu0 0.0
  %1662 = vmatpush1.msra.mxu0 0.0
  %1663 = vmatprep.subr.mxu0 0.0
  %1664 = vmatpush1.msra.mxu0 0.0
  %1665 = vmatprep.subr.mxu0 0.0
  %1666 = vmatpush1.msra.mxu0 0.0
  %1667 = vmatprep.subr.mxu0 0.0
  %1668 = vmatpush1.msra.mxu0 0.0
  %1669 = vmatprep.subr.mxu0 0.0
  %1670 = vmatpush1.msra.mxu0 0.0
  %1671 = vmatprep.subr.mxu0 0.0
  %1672 = vmatpush1.msra.mxu0 0.0
  %1673 = vmatprep.subr.mxu0 0.0
  %1674 = vmatpush1.msra.mxu0 0.0
  %1675 = vmatprep.subr.mxu0 0.0
  %1676 = vmatpush1.msra.mxu0 0.0
  %1677 = vmatprep.subr.mxu0 0.0
  %1678 = vmatpush1.msra.mxu0 0.0
  %1679 = vmatprep.subr.mxu0 0.0
  %1680 = vmatpush1.msra.mxu0 0.0
  %1681 = vmatprep.subr.mxu0 0.0
  %1682 = vmatpush1.msra.mxu0 0.0
  %1683 = vmatprep.subr.mxu0 0.0
  %1684 = vmatpush1.msra.mxu0 0.0
  %1685 = vmatprep.subr.mxu0 0.0
  %1686 = vmatpush1.msra.mxu0 0.0
  %1687 = vmatprep.subr.mxu0 0.0
  %1688 = vmatpush1.msra.mxu0 0.0
  %1689 = vmatprep.subr.mxu0 0.0
  %1690 = vmatpush1.msra.mxu0 0.0
  %1691 = vmatprep.mubr.f32.mxu0 0.0
  %1692 = vmatmul.mubr.f32.gmra.mrb[0].mxu0 %v1402
  %v1693 = vpop.f32.mrb[0].mxu0
  %v1694 = vadd.f32 0.0, %v1693
  %v1695 = vpop.f32.mrb[0].mxu0
  %v1696 = vadd.f32 0.0, %v1695
  %1697 = vmatprep.mubr.f32.mxu0 0.0
  %1698 = vmatmul.mubr.f32.gmra.mrb[0].mxu0 %v1403
  %v1699 = vpop.f32.mrb[0].mxu0
  %v1700 = vadd.f32 0.0, %v1699
  %v1701 = vpop.f32.mrb[0].mxu0
  %v1702 = vadd.f32 0.0, %v1701
  %1703 = vdwg.mxu0
  %1704 = vmatprep.subr.mxu0 %v1696
  %1705 = vmatpush1.msra.mxu0 %v1694
  %1706 = vmatprep.subr.mxu0 %v1702
  %1707 = vmatpush1.msra.mxu0 %v1700
  %1708 = vmatprep.subr.mxu0 0.0
  %1709 = vmatpush1.msra.mxu0 0.0
  %1710 = vmatprep.subr.mxu0 0.0
  %1711 = vmatpush1.msra.mxu0 0.0
  %1712 = vmatprep.subr.mxu0 0.0
  %1713 = vmatpush1.msra.mxu0 0.0
  %1714 = vmatprep.subr.mxu0 0.0
  %1715 = vmatpush1.msra.mxu0 0.0
  %1716 = vmatprep.subr.mxu0 0.0
  %1717 = vmatpush1.msra.mxu0 0.0
  %1718 = vmatprep.subr.mxu0 0.0
  %1719 = vmatpush1.msra.mxu0 0.0
  %1720 = vmatprep.subr.mxu0 0.0
  %1721 = vmatpush1.msra.mxu0 0.0
  %1722 = vmatprep.subr.mxu0 0.0
  %1723 = vmatpush1.msra.mxu0 0.0
  %1724 = vmatprep.subr.mxu0 0.0
  %1725 = vmatpush1.msra.mxu0 0.0
  %1726 = vmatprep.subr.mxu0 0.0
  %1727 = vmatpush1.msra.mxu0 0.0
  %1728 = vmatprep.subr.mxu0 0.0
  %1729 = vmatpush1.msra.mxu0 0.0
  %1730 = vmatprep.subr.mxu0 0.0
  %1731 = vmatpush1.msra.mxu0 0.0
  %1732 = vmatprep.subr.mxu0 0.0
  %1733 = vmatpush1.msra.mxu0 0.0
  %1734 = vmatprep.subr.mxu0 0.0
  %1735 = vmatpush1.msra.mxu0 0.0
  %1736 = vmatprep.subr.mxu0 0.0
  %1737 = vmatpush1.msra.mxu0 0.0
  %1738 = vmatprep.subr.mxu0 0.0
  %1739 = vmatpush1.msra.mxu0 0.0
  %1740 = vmatprep.subr.mxu0 0.0
  %1741 = vmatpush1.msra.mxu0 0.0
  %1742 = vmatprep.subr.mxu0 0.0
  %1743 = vmatpush1.msra.mxu0 0.0
  %1744 = vmatprep.subr.mxu0 0.0
  %1745 = vmatpush1.msra.mxu0 0.0
  %1746 = vmatprep.subr.mxu0 0.0
  %1747 = vmatpush1.msra.mxu0 0.0
  %1748 = vmatprep.subr.mxu0 0.0
  %1749 = vmatpush1.msra.mxu0 0.0
  %1750 = vmatprep.subr.mxu0 0.0
  %1751 = vmatpush1.msra.mxu0 0.0
  %1752 = vmatprep.subr.mxu0 0.0
  %1753 = vmatpush1.msra.mxu0 0.0
  %1754 = vmatprep.subr.mxu0 0.0
  %1755 = vmatpush1.msra.mxu0 0.0
  %1756 = vmatprep.subr.mxu0 0.0
  %1757 = vmatpush1.msra.mxu0 0.0
  %1758 = vmatprep.subr.mxu0 0.0
  %1759 = vmatpush1.msra.mxu0 0.0
  %1760 = vmatprep.subr.mxu0 0.0
  %1761 = vmatpush1.msra.mxu0 0.0
  %1762 = vmatprep.subr.mxu0 0.0
  %1763 = vmatpush1.msra.mxu0 0.0
  %1764 = vmatprep.subr.mxu0 0.0
  %1765 = vmatpush1.msra.mxu0 0.0
  %1766 = vmatprep.subr.mxu0 0.0
  %1767 = vmatpush1.msra.mxu0 0.0
  %1768 = vmatprep.mubr.f32.mxu0 0.0
  %1769 = vmatmul.mubr.f32.gmra.mrb[0].mxu0 %v1519
  %v1770 = vpop.f32.mrb[0].mxu0
  %v1771 = vadd.f32 0.0, %v1770
  %v1772 = vpop.f32.mrb[0].mxu0
  %v1773 = vadd.f32 0.0, %v1772
  %1774 = vmatprep.mubr.f32.mxu0 0.0
  %1775 = vmatmul.mubr.f32.gmra.mrb[0].mxu0 %v1522
  %v1776 = vpop.f32.mrb[0].mxu0
  %v1777 = vadd.f32 0.0, %v1776
  %v1778 = vpop.f32.mrb[0].mxu0
  %v1779 = vadd.f32 0.0, %v1778
  %1780 = vmatprep.mubr.f32.mxu0 0.0
  %1781 = vmatmul.mubr.f32.gmra.mrb[0].mxu0 %v1525
  %v1782 = vpop.f32.mrb[0].mxu0
  %v1783 = vadd.f32 0.0, %v1782
  %v1784 = vpop.f32.mrb[0].mxu0
  %v1785 = vadd.f32 0.0, %v1784
  %1786 = vmatprep.mubr.f32.mxu0 0.0
  %1787 = vmatmul.mubr.f32.gmra.mrb[0].mxu0 %v1528
  %v1788 = vpop.f32.mrb[0].mxu0
  %v1789 = vadd.f32 0.0, %v1788
  %v1790 = vpop.f32.mrb[0].mxu0
  %v1791 = vadd.f32 0.0, %v1790
  %1792 = vdwg.mxu0
  %s1793 = scalar_lea.vmem %s9, 64
  %1794 = vst [vmem:[%s1793] sm:$0xff] %v1771
  %1795 = vst [vmem:[%s1793 + $0x8] sm:$0xff] %v1773
  %1796 = vst [vmem:[%s1793 + $0x10] sm:$0xff] %v1777
  %1797 = vst [vmem:[%s1793 + $0x18] sm:$0xff] %v1779
  %1798 = vst [vmem:[%s1793 + $0x20] sm:$0xff] %v1783
  %1799 = vst [vmem:[%s1793 + $0x28] sm:$0xff] %v1785
  %1800 = vst [vmem:[%s1793 + $0x30] sm:$0xff] %v1789
  %1801 = vst [vmem:[%s1793 + $0x38] sm:$0xff] %v1791
  // Predicated region
  $region38: #{upblock_forward.1} parent=0 // pred_check
    _
  $region39: #{upblock_forward.1} parent=0 // pred_check_branch
    %1803 = sbr.rel (0) target = $region41
  $region40: #{upblock_forward.1} parent=0 // pred_region
    _
  $region41: #{upblock_forward.1} parent=0 // pred_fallthru
    _
  // Predicated region
  $region42: #{upblock_forward.1} parent=0 // pred_check
    _
  $region43: #{upblock_forward.1} parent=0 // pred_check_branch
    %1805 = sbr.rel (0) target = $region45
  $region44: #{upblock_forward.1} parent=0 // pred_region
    _
  $region45: #{upblock_forward.1} parent=0 // pred_fallthru
    _

</llo_original>
